<compile_context>
chip_gen: v6e
topology: v6e:2x2x1
jax: 0.10.0
libtpu: 0.0.40
codegen_flags: <defaults>
</compile_context>

<pallas_src>
import functools

import jax
import jax.numpy as jnp
import numpy as np
from jax import lax
from jax.experimental import pallas as pl
from jax.experimental.pallas import tpu as pltpu  # noqa: F401  (kept for future VMEM/CompilerParams use)


# ----------------------------------------------------------------------------
# Fused kernel: all LSTM layers + dense head, single invocation, no grid.
# Gate order follows PyTorch nn.LSTM: [i, f, g, o].
# Ref order: x2d, (wih_t, whh_t, bias) per layer, wd_pad, bd_pad, out.
# B here is the sublane-padded batch (multiple of 8).
# ----------------------------------------------------------------------------
def _fused_lstm_dense_kernel(*refs, T, B, hidden_sizes):
    L = len(hidden_sizes)
    x_ref = refs[0]
    w_refs = refs[1:1 + 3 * L]
    wd_ref = refs[1 + 3 * L]
    bd_ref = refs[2 + 3 * L]
    out_ref = refs[3 + 3 * L]

    cur = x_ref[...]                     # (T*B, F) time-major flattened input
    h = None
    for l in range(L):
        H = hidden_sizes[l]
        wih = w_refs[3 * l][...]         # (F_in, 4H)
        whh = w_refs[3 * l + 1][...]     # (H, 4H)
        b = w_refs[3 * l + 2][...]       # (1, 4H)  (= b_ih + b_hh, folded once)

        # Hoisted input projection + bias for ALL timesteps: one big MXU matmul.
        proj = jnp.dot(cur, wih, preferred_element_type=jnp.float32) + b   # (T*B, 4H)

        h = jnp.zeros((B, H), jnp.float32)
        c = jnp.zeros((B, H), jnp.float32)
        hs = []

        # Fully unrolled time recurrence (T small and static). With B a multiple of 8,
        # every proj slice is sublane-tile aligned.
        for t in range(T):
            gates = proj[t * B:(t + 1) * B, :] + jnp.dot(
                h, whh, preferred_element_type=jnp.float32)                # (B, 4H)
            # Full-width nonlinearities over the whole 128-lane gates vreg, slice after.
            sig = jax.nn.sigmoid(gates)
            th = jnp.tanh(gates)
            i_g = sig[:, 0 * H:1 * H]
            f_g = sig[:, 1 * H:2 * H]
            g_g = th[:, 2 * H:3 * H]
            o_g = sig[:, 3 * H:4 * H]
            c = f_g * c + i_g * g_g
            h = o_g * jnp.tanh(c)
            if l < L - 1:
                hs.append(h)             # keep intermediate sequence in vregs only

        if l < L - 1:
            cur = jnp.concatenate(hs, axis=0)     # (T*B, H) input to the next layer

    # Dense head on the final-timestep hidden state; lane-dense (B, 128)-padded output.
    out_ref[...] = (
        jnp.dot(h, wd_ref[...], preferred_element_type=jnp.float32) + bd_ref[...]
    ).astype(out_ref.dtype)


# ----------------------------------------------------------------------------
# One-time weight preparation (hoisted out of the per-call path).
# ----------------------------------------------------------------------------
def _round_up(x, m):
    return ((x + m - 1) // m) * m


def prepare_params(params):
    lstm_layers = params["lstms"]
    hidden_sizes = tuple(int(layer["w_hh"].shape[1]) for layer in lstm_layers)
    O = int(params["dense_w"].shape[0])
    O_pad = max(128, _round_up(O, 128))

    weights = []
    for layer in lstm_layers:
        H = int(layer["w_hh"].shape[1])
        wih_t = jnp.transpose(layer["w_ih"]).astype(jnp.float32)            # (F_in, 4H)
        whh_t = jnp.transpose(layer["w_hh"]).astype(jnp.float32)            # (H, 4H)
        bias = (layer["b_ih"] + layer["b_hh"]).reshape(1, 4 * H).astype(jnp.float32)
        weights += [wih_t, whh_t, bias]

    H_last = hidden_sizes[-1]
    wd_t = jnp.transpose(params["dense_w"]).astype(jnp.float32)             # (H_last, O)
    wd_pad = jnp.zeros((H_last, O_pad), jnp.float32).at[:, :O].set(wd_t)
    bd_pad = jnp.zeros((1, O_pad), jnp.float32).at[:, :O].set(
        params["dense_b"].reshape(1, O).astype(jnp.float32))
    weights += [wd_pad, bd_pad]

    meta = {"hidden_sizes": hidden_sizes, "O": O, "O_pad": O_pad}
    return tuple(weights), meta


# ----------------------------------------------------------------------------
# Full model forward (matches base_lstm_model.forward), single pallas_call.
# ----------------------------------------------------------------------------
@functools.partial(jax.jit, static_argnames=("hidden_sizes", "O", "O_pad"))
def _forward_impl(x_btf, weights, *, hidden_sizes, O, O_pad):
    B, T, F = x_btf.shape
    L = len(hidden_sizes)
    B_pad = max(8, _round_up(B, 8))

    # batch_first (B,T,F) -> time-major, batch-padded to a full sublane tile,
    # flattened to (T*B_pad, F) so layer 0's input projection is a single matmul.
    x_t = jnp.transpose(x_btf, (1, 0, 2)).astype(jnp.float32)               # (T, B, F)
    x_t = jnp.pad(x_t, ((0, 0), (0, B_pad - B), (0, 0)))                    # (T, B_pad, F)
    x2d = x_t.reshape(T * B_pad, F)

    inputs = [x2d]
    in_specs = [pl.BlockSpec((T * B_pad, F), lambda: (0, 0))]
    for l in range(L):
        wih_t, whh_t, bias = weights[3 * l], weights[3 * l + 1], weights[3 * l + 2]
        inputs += [wih_t, whh_t, bias]
        in_specs += [
            pl.BlockSpec(wih_t.shape, lambda: (0, 0)),
            pl.BlockSpec(whh_t.shape, lambda: (0, 0)),
            pl.BlockSpec(bias.shape, lambda: (0, 0)),
        ]

    wd_pad, bd_pad = weights[-2], weights[-1]
    inputs += [wd_pad, bd_pad]
    in_specs += [
        pl.BlockSpec(wd_pad.shape, lambda: (0, 0)),
        pl.BlockSpec(bd_pad.shape, lambda: (0, 0)),
    ]

    kernel = functools.partial(
        _fused_lstm_dense_kernel, T=T, B=B_pad, hidden_sizes=hidden_sizes)

    out = pl.pallas_call(
        kernel,
        out_shape=jax.ShapeDtypeStruct((B_pad, O_pad), jnp.float32),
        in_specs=in_specs,
        out_specs=pl.BlockSpec((B_pad, O_pad), lambda: (0, 0)),
    )(*inputs)

    # Slice the real batch rows / output lanes back out; torch.squeeze semantics.
    return jnp.squeeze(out[:B, :O])


def base_lstm_model_forward(x_btf, prepared):
    weights, meta = prepared
    return _forward_impl(
        x_btf, weights,
        hidden_sizes=meta["hidden_sizes"], O=meta["O"], O_pad=meta["O_pad"])


# ----------------------------------------------------------------------------
# Pure-JAX reference (lax.scan) for a correctness check.
# ----------------------------------------------------------------------------
def _ref_lstm_layer(x_btf, w_ih, w_hh, b_ih, b_hh):
    B, T, F = x_btf.shape
    H = w_hh.shape[1]

    def step(carry, x_t):
        h, c = carry
        gates = x_t @ w_ih.T + h @ w_hh.T + b_ih + b_hh
        i = jax.nn.sigmoid(gates[:, 0 * H:1 * H])
        f = jax.nn.sigmoid(gates[:, 1 * H:2 * H])
        g = jnp.tanh(gates[:, 2 * H:3 * H])
        o = jax.nn.sigmoid(gates[:, 3 * H:4 * H])
        c_new = f * c + i * g
        h_new = o * jnp.tanh(c_new)
        return (h_new, c_new), h_new

    init = (jnp.zeros((B, H), jnp.float32), jnp.zeros((B, H), jnp.float32))
    _, hs = lax.scan(step, init, jnp.transpose(x_btf, (1, 0, 2)))
    return jnp.transpose(hs, (1, 0, 2))


def _ref_forward(x_btf, params):
    x = x_btf
    for layer in params["lstms"]:
        x = _ref_lstm_layer(x, layer["w_ih"], layer["w_hh"],
                            layer["b_ih"], layer["b_hh"])
    out = x @ params["dense_w"].T + params["dense_b"]
    return jnp.squeeze(out[:, -1, :])


# ----------------------------------------------------------------------------
# Deterministic parameter init (PyTorch-style uniform(-1/sqrt(H), 1/sqrt(H))).
# ----------------------------------------------------------------------------
def init_params(key, nodes, num_input_features, num_output_features):
    input_sizes = [num_input_features] + list(nodes[:-1])
    params = {"lstms": []}
    for H, F in zip(nodes, input_sizes):
        k = 1.0 / np.sqrt(H)
        key, k1, k2, k3, k4 = jax.random.split(key, 5)
        params["lstms"].append({
            "w_ih": jax.random.uniform(k1, (4 * H, F), jnp.float32, -k, k),
            "w_hh": jax.random.uniform(k2, (4 * H, H), jnp.float32, -k, k),
            "b_ih": jax.random.uniform(k3, (4 * H,), jnp.float32, -k, k),
            "b_hh": jax.random.uniform(k4, (4 * H,), jnp.float32, -k, k),
        })
    H_last = nodes[-1]
    kd = 1.0 / np.sqrt(H_last)
    key, k1, k2 = jax.random.split(key, 3)
    params["dense_w"] = jax.random.uniform(k1, (num_output_features, H_last),
                                           jnp.float32, -kd, kd)
    params["dense_b"] = jax.random.uniform(k2, (num_output_features,),
                                           jnp.float32, -kd, kd)
    return params


if __name__ == "__main__":
    # Small shapes consistent with the module: batch=2, seq=8, features=4,
    # nodes=[32, 32], output features=3.
    B, T, F = 2, 8, 4
    nodes = [32, 32]
    num_out = 3

    key = jax.random.PRNGKey(0)
    key, kx = jax.random.split(key)
    x = jax.random.normal(kx, (B, T, F), jnp.float32)

    params = init_params(key, nodes, F, num_out)
    prepared = prepare_params(params)     # one-time weight prep (hoisted out of forward)

    out = jax.block_until_ready(base_lstm_model_forward(x, prepared))

    ref = jax.block_until_ready(_ref_forward(x, params))
    np.testing.assert_allclose(np.asarray(out), np.asarray(ref),
                               rtol=1e-4, atol=1e-4)

    print("KERNEL_OK")
</pallas_src>

<mosaic_0001>
module attributes {stable_mosaic.version = 11 : i64} {
  func.func @_fused_lstm_dense_kernel(%arg0: memref<64x4xf32, #tpu.memory_space<vmem>>, %arg1: memref<4x128xf32, #tpu.memory_space<vmem>>, %arg2: memref<32x128xf32, #tpu.memory_space<vmem>>, %arg3: memref<1x128xf32, #tpu.memory_space<vmem>>, %arg4: memref<32x128xf32, #tpu.memory_space<vmem>>, %arg5: memref<32x128xf32, #tpu.memory_space<vmem>>, %arg6: memref<1x128xf32, #tpu.memory_space<vmem>>, %arg7: memref<32x128xf32, #tpu.memory_space<vmem>>, %arg8: memref<1x128xf32, #tpu.memory_space<vmem>>, %arg9: memref<8x128xf32, #tpu.memory_space<vmem>>) attributes {dimension_semantics = [], scalar_prefetch = 0 : i64, scratch_operands = 0 : i64, tpu.core_type = #tpu.core_type<tc>} {
    %c0 = arith.constant 0 : index
    %c0_0 = arith.constant 0 : index
    %0 = vector.load %arg0[%c0, %c0_0] : memref<64x4xf32, #tpu.memory_space<vmem>>, vector<64x4xf32>
    %c0_1 = arith.constant 0 : index
    %c0_2 = arith.constant 0 : index
    %1 = vector.load %arg1[%c0_1, %c0_2] : memref<4x128xf32, #tpu.memory_space<vmem>>, vector<4x128xf32>
    %c0_3 = arith.constant 0 : index
    %c0_4 = arith.constant 0 : index
    %2 = vector.load %arg2[%c0_3, %c0_4] : memref<32x128xf32, #tpu.memory_space<vmem>>, vector<32x128xf32>
    %c0_5 = arith.constant 0 : index
    %c0_6 = arith.constant 0 : index
    %3 = vector.load %arg3[%c0_5, %c0_6] : memref<1x128xf32, #tpu.memory_space<vmem>>, vector<1x128xf32>
    %cst = arith.constant dense<0.000000e+00> : vector<64x128xf32>
    %4 = tpu.matmul %0, %1, %cst {dimension_numbers = #tpu.dot_dimension_numbers<[1], [0], [0], [1], [0, 0, 1, 1], [], []>} : vector<64x4xf32>, vector<4x128xf32>, vector<64x128xf32> -> vector<64x128xf32>
    %5 = vector.broadcast %3 : vector<1x128xf32> to vector<64x128xf32>
    %6 = arith.addf %4, %5 : vector<64x128xf32>
    %cst_7 = arith.constant 0.000000e+00 : f32
    %7 = vector.broadcast %cst_7 : f32 to vector<8x32xf32>
    %cst_8 = arith.constant 0.000000e+00 : f32
    %8 = vector.broadcast %cst_8 : f32 to vector<8x32xf32>
    %9 = vector.extract_strided_slice %6 {offsets = [0, 0], sizes = [8, 128], strides = [1, 1]} : vector<64x128xf32> to vector<8x128xf32>
    %cst_9 = arith.constant dense<0.000000e+00> : vector<8x128xf32>
    %10 = tpu.matmul %7, %2, %cst_9 {dimension_numbers = #tpu.dot_dimension_numbers<[1], [0], [0], [1], [0, 0, 1, 1], [], []>} : vector<8x32xf32>, vector<32x128xf32>, vector<8x128xf32> -> vector<8x128xf32>
    %11 = arith.addf %9, %10 : vector<8x128xf32>
    %12 = arith.negf %11 : vector<8x128xf32>
    %13 = math.exp %12 : vector<8x128xf32>
    %cst_10 = arith.constant 1.000000e+00 : f32
    %14 = vector.broadcast %cst_10 : f32 to vector<8x128xf32>
    %15 = arith.addf %14, %13 : vector<8x128xf32>
    %16 = arith.divf %14, %15 : vector<8x128xf32>
    %17 = math.tanh %11 : vector<8x128xf32>
    %18 = vector.extract_strided_slice %16 {offsets = [0, 0], sizes = [8, 32], strides = [1, 1]} : vector<8x128xf32> to vector<8x32xf32>
    %19 = vector.extract_strided_slice %16 {offsets = [0, 32], sizes = [8, 32], strides = [1, 1]} : vector<8x128xf32> to vector<8x32xf32>
    %20 = vector.extract_strided_slice %17 {offsets = [0, 64], sizes = [8, 32], strides = [1, 1]} : vector<8x128xf32> to vector<8x32xf32>
    %21 = vector.extract_strided_slice %16 {offsets = [0, 96], sizes = [8, 32], strides = [1, 1]} : vector<8x128xf32> to vector<8x32xf32>
    %22 = arith.mulf %19, %8 : vector<8x32xf32>
    %23 = arith.mulf %18, %20 : vector<8x32xf32>
    %24 = arith.addf %22, %23 : vector<8x32xf32>
    %25 = math.tanh %24 : vector<8x32xf32>
    %26 = arith.mulf %21, %25 : vector<8x32xf32>
    %27 = vector.extract_strided_slice %6 {offsets = [8, 0], sizes = [8, 128], strides = [1, 1]} : vector<64x128xf32> to vector<8x128xf32>
    %cst_11 = arith.constant dense<0.000000e+00> : vector<8x128xf32>
    %28 = tpu.matmul %26, %2, %cst_11 {dimension_numbers = #tpu.dot_dimension_numbers<[1], [0], [0], [1], [0, 0, 1, 1], [], []>} : vector<8x32xf32>, vector<32x128xf32>, vector<8x128xf32> -> vector<8x128xf32>
    %29 = arith.addf %27, %28 : vector<8x128xf32>
    %30 = arith.negf %29 : vector<8x128xf32>
    %31 = math.exp %30 : vector<8x128xf32>
    %cst_12 = arith.constant 1.000000e+00 : f32
    %32 = vector.broadcast %cst_12 : f32 to vector<8x128xf32>
    %33 = arith.addf %32, %31 : vector<8x128xf32>
    %34 = arith.divf %32, %33 : vector<8x128xf32>
    %35 = math.tanh %29 : vector<8x128xf32>
    %36 = vector.extract_strided_slice %34 {offsets = [0, 0], sizes = [8, 32], strides = [1, 1]} : vector<8x128xf32> to vector<8x32xf32>
    %37 = vector.extract_strided_slice %34 {offsets = [0, 32], sizes = [8, 32], strides = [1, 1]} : vector<8x128xf32> to vector<8x32xf32>
    %38 = vector.extract_strided_slice %35 {offsets = [0, 64], sizes = [8, 32], strides = [1, 1]} : vector<8x128xf32> to vector<8x32xf32>
    %39 = vector.extract_strided_slice %34 {offsets = [0, 96], sizes = [8, 32], strides = [1, 1]} : vector<8x128xf32> to vector<8x32xf32>
    %40 = arith.mulf %37, %24 : vector<8x32xf32>
    %41 = arith.mulf %36, %38 : vector<8x32xf32>
    %42 = arith.addf %40, %41 : vector<8x32xf32>
    %43 = math.tanh %42 : vector<8x32xf32>
    %44 = arith.mulf %39, %43 : vector<8x32xf32>
    %45 = vector.extract_strided_slice %6 {offsets = [16, 0], sizes = [8, 128], strides = [1, 1]} : vector<64x128xf32> to vector<8x128xf32>
    %cst_13 = arith.constant dense<0.000000e+00> : vector<8x128xf32>
    %46 = tpu.matmul %44, %2, %cst_13 {dimension_numbers = #tpu.dot_dimension_numbers<[1], [0], [0], [1], [0, 0, 1, 1], [], []>} : vector<8x32xf32>, vector<32x128xf32>, vector<8x128xf32> -> vector<8x128xf32>
    %47 = arith.addf %45, %46 : vector<8x128xf32>
    %48 = arith.negf %47 : vector<8x128xf32>
    %49 = math.exp %48 : vector<8x128xf32>
    %cst_14 = arith.constant 1.000000e+00 : f32
    %50 = vector.broadcast %cst_14 : f32 to vector<8x128xf32>
    %51 = arith.addf %50, %49 : vector<8x128xf32>
    %52 = arith.divf %50, %51 : vector<8x128xf32>
    %53 = math.tanh %47 : vector<8x128xf32>
    %54 = vector.extract_strided_slice %52 {offsets = [0, 0], sizes = [8, 32], strides = [1, 1]} : vector<8x128xf32> to vector<8x32xf32>
    %55 = vector.extract_strided_slice %52 {offsets = [0, 32], sizes = [8, 32], strides = [1, 1]} : vector<8x128xf32> to vector<8x32xf32>
    %56 = vector.extract_strided_slice %53 {offsets = [0, 64], sizes = [8, 32], strides = [1, 1]} : vector<8x128xf32> to vector<8x32xf32>
    %57 = vector.extract_strided_slice %52 {offsets = [0, 96], sizes = [8, 32], strides = [1, 1]} : vector<8x128xf32> to vector<8x32xf32>
    %58 = arith.mulf %55, %42 : vector<8x32xf32>
    %59 = arith.mulf %54, %56 : vector<8x32xf32>
    %60 = arith.addf %58, %59 : vector<8x32xf32>
    %61 = math.tanh %60 : vector<8x32xf32>
    %62 = arith.mulf %57, %61 : vector<8x32xf32>
    %63 = vector.extract_strided_slice %6 {offsets = [24, 0], sizes = [8, 128], strides = [1, 1]} : vector<64x128xf32> to vector<8x128xf32>
    %cst_15 = arith.constant dense<0.000000e+00> : vector<8x128xf32>
    %64 = tpu.matmul %62, %2, %cst_15 {dimension_numbers = #tpu.dot_dimension_numbers<[1], [0], [0], [1], [0, 0, 1, 1], [], []>} : vector<8x32xf32>, vector<32x128xf32>, vector<8x128xf32> -> vector<8x128xf32>
    %65 = arith.addf %63, %64 : vector<8x128xf32>
    %66 = arith.negf %65 : vector<8x128xf32>
    %67 = math.exp %66 : vector<8x128xf32>
    %cst_16 = arith.constant 1.000000e+00 : f32
    %68 = vector.broadcast %cst_16 : f32 to vector<8x128xf32>
    %69 = arith.addf %68, %67 : vector<8x128xf32>
    %70 = arith.divf %68, %69 : vector<8x128xf32>
    %71 = math.tanh %65 : vector<8x128xf32>
    %72 = vector.extract_strided_slice %70 {offsets = [0, 0], sizes = [8, 32], strides = [1, 1]} : vector<8x128xf32> to vector<8x32xf32>
    %73 = vector.extract_strided_slice %70 {offsets = [0, 32], sizes = [8, 32], strides = [1, 1]} : vector<8x128xf32> to vector<8x32xf32>
    %74 = vector.extract_strided_slice %71 {offsets = [0, 64], sizes = [8, 32], strides = [1, 1]} : vector<8x128xf32> to vector<8x32xf32>
    %75 = vector.extract_strided_slice %70 {offsets = [0, 96], sizes = [8, 32], strides = [1, 1]} : vector<8x128xf32> to vector<8x32xf32>
    %76 = arith.mulf %73, %60 : vector<8x32xf32>
    %77 = arith.mulf %72, %74 : vector<8x32xf32>
    %78 = arith.addf %76, %77 : vector<8x32xf32>
    %79 = math.tanh %78 : vector<8x32xf32>
    %80 = arith.mulf %75, %79 : vector<8x32xf32>
    %81 = vector.extract_strided_slice %6 {offsets = [32, 0], sizes = [8, 128], strides = [1, 1]} : vector<64x128xf32> to vector<8x128xf32>
    %cst_17 = arith.constant dense<0.000000e+00> : vector<8x128xf32>
    %82 = tpu.matmul %80, %2, %cst_17 {dimension_numbers = #tpu.dot_dimension_numbers<[1], [0], [0], [1], [0, 0, 1, 1], [], []>} : vector<8x32xf32>, vector<32x128xf32>, vector<8x128xf32> -> vector<8x128xf32>
    %83 = arith.addf %81, %82 : vector<8x128xf32>
    %84 = arith.negf %83 : vector<8x128xf32>
    %85 = math.exp %84 : vector<8x128xf32>
    %cst_18 = arith.constant 1.000000e+00 : f32
    %86 = vector.broadcast %cst_18 : f32 to vector<8x128xf32>
    %87 = arith.addf %86, %85 : vector<8x128xf32>
    %88 = arith.divf %86, %87 : vector<8x128xf32>
    %89 = math.tanh %83 : vector<8x128xf32>
    %90 = vector.extract_strided_slice %88 {offsets = [0, 0], sizes = [8, 32], strides = [1, 1]} : vector<8x128xf32> to vector<8x32xf32>
    %91 = vector.extract_strided_slice %88 {offsets = [0, 32], sizes = [8, 32], strides = [1, 1]} : vector<8x128xf32> to vector<8x32xf32>
    %92 = vector.extract_strided_slice %89 {offsets = [0, 64], sizes = [8, 32], strides = [1, 1]} : vector<8x128xf32> to vector<8x32xf32>
    %93 = vector.extract_strided_slice %88 {offsets = [0, 96], sizes = [8, 32], strides = [1, 1]} : vector<8x128xf32> to vector<8x32xf32>
    %94 = arith.mulf %91, %78 : vector<8x32xf32>
    %95 = arith.mulf %90, %92 : vector<8x32xf32>
    %96 = arith.addf %94, %95 : vector<8x32xf32>
    %97 = math.tanh %96 : vector<8x32xf32>
    %98 = arith.mulf %93, %97 : vector<8x32xf32>
    %99 = vector.extract_strided_slice %6 {offsets = [40, 0], sizes = [8, 128], strides = [1, 1]} : vector<64x128xf32> to vector<8x128xf32>
    %cst_19 = arith.constant dense<0.000000e+00> : vector<8x128xf32>
    %100 = tpu.matmul %98, %2, %cst_19 {dimension_numbers = #tpu.dot_dimension_numbers<[1], [0], [0], [1], [0, 0, 1, 1], [], []>} : vector<8x32xf32>, vector<32x128xf32>, vector<8x128xf32> -> vector<8x128xf32>
    %101 = arith.addf %99, %100 : vector<8x128xf32>
    %102 = arith.negf %101 : vector<8x128xf32>
    %103 = math.exp %102 : vector<8x128xf32>
    %cst_20 = arith.constant 1.000000e+00 : f32
    %104 = vector.broadcast %cst_20 : f32 to vector<8x128xf32>
    %105 = arith.addf %104, %103 : vector<8x128xf32>
    %106 = arith.divf %104, %105 : vector<8x128xf32>
    %107 = math.tanh %101 : vector<8x128xf32>
    %108 = vector.extract_strided_slice %106 {offsets = [0, 0], sizes = [8, 32], strides = [1, 1]} : vector<8x128xf32> to vector<8x32xf32>
    %109 = vector.extract_strided_slice %106 {offsets = [0, 32], sizes = [8, 32], strides = [1, 1]} : vector<8x128xf32> to vector<8x32xf32>
    %110 = vector.extract_strided_slice %107 {offsets = [0, 64], sizes = [8, 32], strides = [1, 1]} : vector<8x128xf32> to vector<8x32xf32>
    %111 = vector.extract_strided_slice %106 {offsets = [0, 96], sizes = [8, 32], strides = [1, 1]} : vector<8x128xf32> to vector<8x32xf32>
    %112 = arith.mulf %109, %96 : vector<8x32xf32>
    %113 = arith.mulf %108, %110 : vector<8x32xf32>
    %114 = arith.addf %112, %113 : vector<8x32xf32>
    %115 = math.tanh %114 : vector<8x32xf32>
    %116 = arith.mulf %111, %115 : vector<8x32xf32>
    %117 = vector.extract_strided_slice %6 {offsets = [48, 0], sizes = [8, 128], strides = [1, 1]} : vector<64x128xf32> to vector<8x128xf32>
    %cst_21 = arith.constant dense<0.000000e+00> : vector<8x128xf32>
    %118 = tpu.matmul %116, %2, %cst_21 {dimension_numbers = #tpu.dot_dimension_numbers<[1], [0], [0], [1], [0, 0, 1, 1], [], []>} : vector<8x32xf32>, vector<32x128xf32>, vector<8x128xf32> -> vector<8x128xf32>
    %119 = arith.addf %117, %118 : vector<8x128xf32>
    %120 = arith.negf %119 : vector<8x128xf32>
    %121 = math.exp %120 : vector<8x128xf32>
    %cst_22 = arith.constant 1.000000e+00 : f32
    %122 = vector.broadcast %cst_22 : f32 to vector<8x128xf32>
    %123 = arith.addf %122, %121 : vector<8x128xf32>
    %124 = arith.divf %122, %123 : vector<8x128xf32>
    %125 = math.tanh %119 : vector<8x128xf32>
    %126 = vector.extract_strided_slice %124 {offsets = [0, 0], sizes = [8, 32], strides = [1, 1]} : vector<8x128xf32> to vector<8x32xf32>
    %127 = vector.extract_strided_slice %124 {offsets = [0, 32], sizes = [8, 32], strides = [1, 1]} : vector<8x128xf32> to vector<8x32xf32>
    %128 = vector.extract_strided_slice %125 {offsets = [0, 64], sizes = [8, 32], strides = [1, 1]} : vector<8x128xf32> to vector<8x32xf32>
    %129 = vector.extract_strided_slice %124 {offsets = [0, 96], sizes = [8, 32], strides = [1, 1]} : vector<8x128xf32> to vector<8x32xf32>
    %130 = arith.mulf %127, %114 : vector<8x32xf32>
    %131 = arith.mulf %126, %128 : vector<8x32xf32>
    %132 = arith.addf %130, %131 : vector<8x32xf32>
    %133 = math.tanh %132 : vector<8x32xf32>
    %134 = arith.mulf %129, %133 : vector<8x32xf32>
    %135 = vector.extract_strided_slice %6 {offsets = [56, 0], sizes = [8, 128], strides = [1, 1]} : vector<64x128xf32> to vector<8x128xf32>
    %cst_23 = arith.constant dense<0.000000e+00> : vector<8x128xf32>
    %136 = tpu.matmul %134, %2, %cst_23 {dimension_numbers = #tpu.dot_dimension_numbers<[1], [0], [0], [1], [0, 0, 1, 1], [], []>} : vector<8x32xf32>, vector<32x128xf32>, vector<8x128xf32> -> vector<8x128xf32>
    %137 = arith.addf %135, %136 : vector<8x128xf32>
    %138 = arith.negf %137 : vector<8x128xf32>
    %139 = math.exp %138 : vector<8x128xf32>
    %cst_24 = arith.constant 1.000000e+00 : f32
    %140 = vector.broadcast %cst_24 : f32 to vector<8x128xf32>
    %141 = arith.addf %140, %139 : vector<8x128xf32>
    %142 = arith.divf %140, %141 : vector<8x128xf32>
    %143 = math.tanh %137 : vector<8x128xf32>
    %144 = vector.extract_strided_slice %142 {offsets = [0, 0], sizes = [8, 32], strides = [1, 1]} : vector<8x128xf32> to vector<8x32xf32>
    %145 = vector.extract_strided_slice %142 {offsets = [0, 32], sizes = [8, 32], strides = [1, 1]} : vector<8x128xf32> to vector<8x32xf32>
    %146 = vector.extract_strided_slice %143 {offsets = [0, 64], sizes = [8, 32], strides = [1, 1]} : vector<8x128xf32> to vector<8x32xf32>
    %147 = vector.extract_strided_slice %142 {offsets = [0, 96], sizes = [8, 32], strides = [1, 1]} : vector<8x128xf32> to vector<8x32xf32>
    %148 = arith.mulf %145, %132 : vector<8x32xf32>
    %149 = arith.mulf %144, %146 : vector<8x32xf32>
    %150 = arith.addf %148, %149 : vector<8x32xf32>
    %151 = math.tanh %150 : vector<8x32xf32>
    %152 = arith.mulf %147, %151 : vector<8x32xf32>
    %153 = tpu.concatenate %26, %44, %62, %80, %98, %116, %134, %152 in 0 : vector<8x32xf32>, vector<8x32xf32>, vector<8x32xf32>, vector<8x32xf32>, vector<8x32xf32>, vector<8x32xf32>, vector<8x32xf32>, vector<8x32xf32> -> vector<64x32xf32>
    %c0_25 = arith.constant 0 : index
    %c0_26 = arith.constant 0 : index
    %154 = vector.load %arg4[%c0_25, %c0_26] : memref<32x128xf32, #tpu.memory_space<vmem>>, vector<32x128xf32>
    %c0_27 = arith.constant 0 : index
    %c0_28 = arith.constant 0 : index
    %155 = vector.load %arg5[%c0_27, %c0_28] : memref<32x128xf32, #tpu.memory_space<vmem>>, vector<32x128xf32>
    %c0_29 = arith.constant 0 : index
    %c0_30 = arith.constant 0 : index
    %156 = vector.load %arg6[%c0_29, %c0_30] : memref<1x128xf32, #tpu.memory_space<vmem>>, vector<1x128xf32>
    %cst_31 = arith.constant dense<0.000000e+00> : vector<64x128xf32>
    %157 = tpu.matmul %153, %154, %cst_31 {dimension_numbers = #tpu.dot_dimension_numbers<[1], [0], [0], [1], [0, 0, 1, 1], [], []>} : vector<64x32xf32>, vector<32x128xf32>, vector<64x128xf32> -> vector<64x128xf32>
    %158 = vector.broadcast %156 : vector<1x128xf32> to vector<64x128xf32>
    %159 = arith.addf %157, %158 : vector<64x128xf32>
    %cst_32 = arith.constant 0.000000e+00 : f32
    %160 = vector.broadcast %cst_32 : f32 to vector<8x32xf32>
    %cst_33 = arith.constant 0.000000e+00 : f32
    %161 = vector.broadcast %cst_33 : f32 to vector<8x32xf32>
    %162 = vector.extract_strided_slice %159 {offsets = [0, 0], sizes = [8, 128], strides = [1, 1]} : vector<64x128xf32> to vector<8x128xf32>
    %cst_34 = arith.constant dense<0.000000e+00> : vector<8x128xf32>
    %163 = tpu.matmul %160, %155, %cst_34 {dimension_numbers = #tpu.dot_dimension_numbers<[1], [0], [0], [1], [0, 0, 1, 1], [], []>} : vector<8x32xf32>, vector<32x128xf32>, vector<8x128xf32> -> vector<8x128xf32>
    %164 = arith.addf %162, %163 : vector<8x128xf32>
    %165 = arith.negf %164 : vector<8x128xf32>
    %166 = math.exp %165 : vector<8x128xf32>
    %cst_35 = arith.constant 1.000000e+00 : f32
    %167 = vector.broadcast %cst_35 : f32 to vector<8x128xf32>
    %168 = arith.addf %167, %166 : vector<8x128xf32>
    %169 = arith.divf %167, %168 : vector<8x128xf32>
    %170 = math.tanh %164 : vector<8x128xf32>
    %171 = vector.extract_strided_slice %169 {offsets = [0, 0], sizes = [8, 32], strides = [1, 1]} : vector<8x128xf32> to vector<8x32xf32>
    %172 = vector.extract_strided_slice %169 {offsets = [0, 32], sizes = [8, 32], strides = [1, 1]} : vector<8x128xf32> to vector<8x32xf32>
    %173 = vector.extract_strided_slice %170 {offsets = [0, 64], sizes = [8, 32], strides = [1, 1]} : vector<8x128xf32> to vector<8x32xf32>
    %174 = vector.extract_strided_slice %169 {offsets = [0, 96], sizes = [8, 32], strides = [1, 1]} : vector<8x128xf32> to vector<8x32xf32>
    %175 = arith.mulf %172, %161 : vector<8x32xf32>
    %176 = arith.mulf %171, %173 : vector<8x32xf32>
    %177 = arith.addf %175, %176 : vector<8x32xf32>
    %178 = math.tanh %177 : vector<8x32xf32>
    %179 = arith.mulf %174, %178 : vector<8x32xf32>
    %180 = vector.extract_strided_slice %159 {offsets = [8, 0], sizes = [8, 128], strides = [1, 1]} : vector<64x128xf32> to vector<8x128xf32>
    %cst_36 = arith.constant dense<0.000000e+00> : vector<8x128xf32>
    %181 = tpu.matmul %179, %155, %cst_36 {dimension_numbers = #tpu.dot_dimension_numbers<[1], [0], [0], [1], [0, 0, 1, 1], [], []>} : vector<8x32xf32>, vector<32x128xf32>, vector<8x128xf32> -> vector<8x128xf32>
    %182 = arith.addf %180, %181 : vector<8x128xf32>
    %183 = arith.negf %182 : vector<8x128xf32>
    %184 = math.exp %183 : vector<8x128xf32>
    %cst_37 = arith.constant 1.000000e+00 : f32
    %185 = vector.broadcast %cst_37 : f32 to vector<8x128xf32>
    %186 = arith.addf %185, %184 : vector<8x128xf32>
    %187 = arith.divf %185, %186 : vector<8x128xf32>
    %188 = math.tanh %182 : vector<8x128xf32>
    %189 = vector.extract_strided_slice %187 {offsets = [0, 0], sizes = [8, 32], strides = [1, 1]} : vector<8x128xf32> to vector<8x32xf32>
    %190 = vector.extract_strided_slice %187 {offsets = [0, 32], sizes = [8, 32], strides = [1, 1]} : vector<8x128xf32> to vector<8x32xf32>
    %191 = vector.extract_strided_slice %188 {offsets = [0, 64], sizes = [8, 32], strides = [1, 1]} : vector<8x128xf32> to vector<8x32xf32>
    %192 = vector.extract_strided_slice %187 {offsets = [0, 96], sizes = [8, 32], strides = [1, 1]} : vector<8x128xf32> to vector<8x32xf32>
    %193 = arith.mulf %190, %177 : vector<8x32xf32>
    %194 = arith.mulf %189, %191 : vector<8x32xf32>
    %195 = arith.addf %193, %194 : vector<8x32xf32>
    %196 = math.tanh %195 : vector<8x32xf32>
    %197 = arith.mulf %192, %196 : vector<8x32xf32>
    %198 = vector.extract_strided_slice %159 {offsets = [16, 0], sizes = [8, 128], strides = [1, 1]} : vector<64x128xf32> to vector<8x128xf32>
    %cst_38 = arith.constant dense<0.000000e+00> : vector<8x128xf32>
    %199 = tpu.matmul %197, %155, %cst_38 {dimension_numbers = #tpu.dot_dimension_numbers<[1], [0], [0], [1], [0, 0, 1, 1], [], []>} : vector<8x32xf32>, vector<32x128xf32>, vector<8x128xf32> -> vector<8x128xf32>
    %200 = arith.addf %198, %199 : vector<8x128xf32>
    %201 = arith.negf %200 : vector<8x128xf32>
    %202 = math.exp %201 : vector<8x128xf32>
    %cst_39 = arith.constant 1.000000e+00 : f32
    %203 = vector.broadcast %cst_39 : f32 to vector<8x128xf32>
    %204 = arith.addf %203, %202 : vector<8x128xf32>
    %205 = arith.divf %203, %204 : vector<8x128xf32>
    %206 = math.tanh %200 : vector<8x128xf32>
    %207 = vector.extract_strided_slice %205 {offsets = [0, 0], sizes = [8, 32], strides = [1, 1]} : vector<8x128xf32> to vector<8x32xf32>
    %208 = vector.extract_strided_slice %205 {offsets = [0, 32], sizes = [8, 32], strides = [1, 1]} : vector<8x128xf32> to vector<8x32xf32>
    %209 = vector.extract_strided_slice %206 {offsets = [0, 64], sizes = [8, 32], strides = [1, 1]} : vector<8x128xf32> to vector<8x32xf32>
    %210 = vector.extract_strided_slice %205 {offsets = [0, 96], sizes = [8, 32], strides = [1, 1]} : vector<8x128xf32> to vector<8x32xf32>
    %211 = arith.mulf %208, %195 : vector<8x32xf32>
    %212 = arith.mulf %207, %209 : vector<8x32xf32>
    %213 = arith.addf %211, %212 : vector<8x32xf32>
    %214 = math.tanh %213 : vector<8x32xf32>
    %215 = arith.mulf %210, %214 : vector<8x32xf32>
    %216 = vector.extract_strided_slice %159 {offsets = [24, 0], sizes = [8, 128], strides = [1, 1]} : vector<64x128xf32> to vector<8x128xf32>
    %cst_40 = arith.constant dense<0.000000e+00> : vector<8x128xf32>
    %217 = tpu.matmul %215, %155, %cst_40 {dimension_numbers = #tpu.dot_dimension_numbers<[1], [0], [0], [1], [0, 0, 1, 1], [], []>} : vector<8x32xf32>, vector<32x128xf32>, vector<8x128xf32> -> vector<8x128xf32>
    %218 = arith.addf %216, %217 : vector<8x128xf32>
    %219 = arith.negf %218 : vector<8x128xf32>
    %220 = math.exp %219 : vector<8x128xf32>
    %cst_41 = arith.constant 1.000000e+00 : f32
    %221 = vector.broadcast %cst_41 : f32 to vector<8x128xf32>
    %222 = arith.addf %221, %220 : vector<8x128xf32>
    %223 = arith.divf %221, %222 : vector<8x128xf32>
    %224 = math.tanh %218 : vector<8x128xf32>
    %225 = vector.extract_strided_slice %223 {offsets = [0, 0], sizes = [8, 32], strides = [1, 1]} : vector<8x128xf32> to vector<8x32xf32>
    %226 = vector.extract_strided_slice %223 {offsets = [0, 32], sizes = [8, 32], strides = [1, 1]} : vector<8x128xf32> to vector<8x32xf32>
    %227 = vector.extract_strided_slice %224 {offsets = [0, 64], sizes = [8, 32], strides = [1, 1]} : vector<8x128xf32> to vector<8x32xf32>
    %228 = vector.extract_strided_slice %223 {offsets = [0, 96], sizes = [8, 32], strides = [1, 1]} : vector<8x128xf32> to vector<8x32xf32>
    %229 = arith.mulf %226, %213 : vector<8x32xf32>
    %230 = arith.mulf %225, %227 : vector<8x32xf32>
    %231 = arith.addf %229, %230 : vector<8x32xf32>
    %232 = math.tanh %231 : vector<8x32xf32>
    %233 = arith.mulf %228, %232 : vector<8x32xf32>
    %234 = vector.extract_strided_slice %159 {offsets = [32, 0], sizes = [8, 128], strides = [1, 1]} : vector<64x128xf32> to vector<8x128xf32>
    %cst_42 = arith.constant dense<0.000000e+00> : vector<8x128xf32>
    %235 = tpu.matmul %233, %155, %cst_42 {dimension_numbers = #tpu.dot_dimension_numbers<[1], [0], [0], [1], [0, 0, 1, 1], [], []>} : vector<8x32xf32>, vector<32x128xf32>, vector<8x128xf32> -> vector<8x128xf32>
    %236 = arith.addf %234, %235 : vector<8x128xf32>
    %237 = arith.negf %236 : vector<8x128xf32>
    %238 = math.exp %237 : vector<8x128xf32>
    %cst_43 = arith.constant 1.000000e+00 : f32
    %239 = vector.broadcast %cst_43 : f32 to vector<8x128xf32>
    %240 = arith.addf %239, %238 : vector<8x128xf32>
    %241 = arith.divf %239, %240 : vector<8x128xf32>
    %242 = math.tanh %236 : vector<8x128xf32>
    %243 = vector.extract_strided_slice %241 {offsets = [0, 0], sizes = [8, 32], strides = [1, 1]} : vector<8x128xf32> to vector<8x32xf32>
    %244 = vector.extract_strided_slice %241 {offsets = [0, 32], sizes = [8, 32], strides = [1, 1]} : vector<8x128xf32> to vector<8x32xf32>
    %245 = vector.extract_strided_slice %242 {offsets = [0, 64], sizes = [8, 32], strides = [1, 1]} : vector<8x128xf32> to vector<8x32xf32>
    %246 = vector.extract_strided_slice %241 {offsets = [0, 96], sizes = [8, 32], strides = [1, 1]} : vector<8x128xf32> to vector<8x32xf32>
    %247 = arith.mulf %244, %231 : vector<8x32xf32>
    %248 = arith.mulf %243, %245 : vector<8x32xf32>
    %249 = arith.addf %247, %248 : vector<8x32xf32>
    %250 = math.tanh %249 : vector<8x32xf32>
    %251 = arith.mulf %246, %250 : vector<8x32xf32>
    %252 = vector.extract_strided_slice %159 {offsets = [40, 0], sizes = [8, 128], strides = [1, 1]} : vector<64x128xf32> to vector<8x128xf32>
    %cst_44 = arith.constant dense<0.000000e+00> : vector<8x128xf32>
    %253 = tpu.matmul %251, %155, %cst_44 {dimension_numbers = #tpu.dot_dimension_numbers<[1], [0], [0], [1], [0, 0, 1, 1], [], []>} : vector<8x32xf32>, vector<32x128xf32>, vector<8x128xf32> -> vector<8x128xf32>
    %254 = arith.addf %252, %253 : vector<8x128xf32>
    %255 = arith.negf %254 : vector<8x128xf32>
    %256 = math.exp %255 : vector<8x128xf32>
    %cst_45 = arith.constant 1.000000e+00 : f32
    %257 = vector.broadcast %cst_45 : f32 to vector<8x128xf32>
    %258 = arith.addf %257, %256 : vector<8x128xf32>
    %259 = arith.divf %257, %258 : vector<8x128xf32>
    %260 = math.tanh %254 : vector<8x128xf32>
    %261 = vector.extract_strided_slice %259 {offsets = [0, 0], sizes = [8, 32], strides = [1, 1]} : vector<8x128xf32> to vector<8x32xf32>
    %262 = vector.extract_strided_slice %259 {offsets = [0, 32], sizes = [8, 32], strides = [1, 1]} : vector<8x128xf32> to vector<8x32xf32>
    %263 = vector.extract_strided_slice %260 {offsets = [0, 64], sizes = [8, 32], strides = [1, 1]} : vector<8x128xf32> to vector<8x32xf32>
    %264 = vector.extract_strided_slice %259 {offsets = [0, 96], sizes = [8, 32], strides = [1, 1]} : vector<8x128xf32> to vector<8x32xf32>
    %265 = arith.mulf %262, %249 : vector<8x32xf32>
    %266 = arith.mulf %261, %263 : vector<8x32xf32>
    %267 = arith.addf %265, %266 : vector<8x32xf32>
    %268 = math.tanh %267 : vector<8x32xf32>
    %269 = arith.mulf %264, %268 : vector<8x32xf32>
    %270 = vector.extract_strided_slice %159 {offsets = [48, 0], sizes = [8, 128], strides = [1, 1]} : vector<64x128xf32> to vector<8x128xf32>
    %cst_46 = arith.constant dense<0.000000e+00> : vector<8x128xf32>
    %271 = tpu.matmul %269, %155, %cst_46 {dimension_numbers = #tpu.dot_dimension_numbers<[1], [0], [0], [1], [0, 0, 1, 1], [], []>} : vector<8x32xf32>, vector<32x128xf32>, vector<8x128xf32> -> vector<8x128xf32>
    %272 = arith.addf %270, %271 : vector<8x128xf32>
    %273 = arith.negf %272 : vector<8x128xf32>
    %274 = math.exp %273 : vector<8x128xf32>
    %cst_47 = arith.constant 1.000000e+00 : f32
    %275 = vector.broadcast %cst_47 : f32 to vector<8x128xf32>
    %276 = arith.addf %275, %274 : vector<8x128xf32>
    %277 = arith.divf %275, %276 : vector<8x128xf32>
    %278 = math.tanh %272 : vector<8x128xf32>
    %279 = vector.extract_strided_slice %277 {offsets = [0, 0], sizes = [8, 32], strides = [1, 1]} : vector<8x128xf32> to vector<8x32xf32>
    %280 = vector.extract_strided_slice %277 {offsets = [0, 32], sizes = [8, 32], strides = [1, 1]} : vector<8x128xf32> to vector<8x32xf32>
    %281 = vector.extract_strided_slice %278 {offsets = [0, 64], sizes = [8, 32], strides = [1, 1]} : vector<8x128xf32> to vector<8x32xf32>
    %282 = vector.extract_strided_slice %277 {offsets = [0, 96], sizes = [8, 32], strides = [1, 1]} : vector<8x128xf32> to vector<8x32xf32>
    %283 = arith.mulf %280, %267 : vector<8x32xf32>
    %284 = arith.mulf %279, %281 : vector<8x32xf32>
    %285 = arith.addf %283, %284 : vector<8x32xf32>
    %286 = math.tanh %285 : vector<8x32xf32>
    %287 = arith.mulf %282, %286 : vector<8x32xf32>
    %288 = vector.extract_strided_slice %159 {offsets = [56, 0], sizes = [8, 128], strides = [1, 1]} : vector<64x128xf32> to vector<8x128xf32>
    %cst_48 = arith.constant dense<0.000000e+00> : vector<8x128xf32>
    %289 = tpu.matmul %287, %155, %cst_48 {dimension_numbers = #tpu.dot_dimension_numbers<[1], [0], [0], [1], [0, 0, 1, 1], [], []>} : vector<8x32xf32>, vector<32x128xf32>, vector<8x128xf32> -> vector<8x128xf32>
    %290 = arith.addf %288, %289 : vector<8x128xf32>
    %291 = arith.negf %290 : vector<8x128xf32>
    %292 = math.exp %291 : vector<8x128xf32>
    %cst_49 = arith.constant 1.000000e+00 : f32
    %293 = vector.broadcast %cst_49 : f32 to vector<8x128xf32>
    %294 = arith.addf %293, %292 : vector<8x128xf32>
    %295 = arith.divf %293, %294 : vector<8x128xf32>
    %296 = math.tanh %290 : vector<8x128xf32>
    %297 = vector.extract_strided_slice %295 {offsets = [0, 0], sizes = [8, 32], strides = [1, 1]} : vector<8x128xf32> to vector<8x32xf32>
    %298 = vector.extract_strided_slice %295 {offsets = [0, 32], sizes = [8, 32], strides = [1, 1]} : vector<8x128xf32> to vector<8x32xf32>
    %299 = vector.extract_strided_slice %296 {offsets = [0, 64], sizes = [8, 32], strides = [1, 1]} : vector<8x128xf32> to vector<8x32xf32>
    %300 = vector.extract_strided_slice %295 {offsets = [0, 96], sizes = [8, 32], strides = [1, 1]} : vector<8x128xf32> to vector<8x32xf32>
    %301 = arith.mulf %298, %285 : vector<8x32xf32>
    %302 = arith.mulf %297, %299 : vector<8x32xf32>
    %303 = arith.addf %301, %302 : vector<8x32xf32>
    %304 = math.tanh %303 : vector<8x32xf32>
    %305 = arith.mulf %300, %304 : vector<8x32xf32>
    %c0_50 = arith.constant 0 : index
    %c0_51 = arith.constant 0 : index
    %306 = vector.load %arg7[%c0_50, %c0_51] : memref<32x128xf32, #tpu.memory_space<vmem>>, vector<32x128xf32>
    %cst_52 = arith.constant dense<0.000000e+00> : vector<8x128xf32>
    %307 = tpu.matmul %305, %306, %cst_52 {dimension_numbers = #tpu.dot_dimension_numbers<[1], [0], [0], [1], [0, 0, 1, 1], [], []>} : vector<8x32xf32>, vector<32x128xf32>, vector<8x128xf32> -> vector<8x128xf32>
    %c0_53 = arith.constant 0 : index
    %c0_54 = arith.constant 0 : index
    %308 = vector.load %arg8[%c0_53, %c0_54] : memref<1x128xf32, #tpu.memory_space<vmem>>, vector<1x128xf32>
    %309 = vector.broadcast %308 : vector<1x128xf32> to vector<8x128xf32>
    %310 = arith.addf %307, %309 : vector<8x128xf32>
    %c0_55 = arith.constant 0 : index
    %c0_56 = arith.constant 0 : index
    %311 = vector.load %arg9[%c0_55, %c0_56] : memref<8x128xf32, #tpu.memory_space<vmem>>, vector<8x128xf32>
    tpu.vector_store %arg9[%c0_55, %c0_56], %310 {strides = array<i32>} : memref<8x128xf32, #tpu.memory_space<vmem>>, vector<8x128xf32>,
    return
  }
}

</mosaic_0001>

<llo_original>
// kernel: _forward_impl.1
$region0: #{_forward_impl.1}
  #allocation0 [shape = 'u32[]', space=smem, size = 0x4, offset = 0x4, fixed_abs, tag = 'smem constant byte address 0x4 - core index']
  #allocation1 [shape = 'u32[144,128]{1,0:T(1,128)}', space=vmem, size = 0x12000, scoped, tag = 'internal scratch']
  %s0 = inlined_call_operand.vmem [shape: f32[64,4], index: 0, kind: input, shape index: {}]
  %s1 = inlined_call_operand.vmem [shape: f32[4,128], index: 1, kind: input, shape index: {}]
  %s2 = inlined_call_operand.vmem [shape: f32[32,128], index: 2, kind: input, shape index: {}]
  %s3 = inlined_call_operand.vmem [shape: f32[1,128], index: 3, kind: input, shape index: {}]
  %s4 = inlined_call_operand.vmem [shape: f32[32,128], index: 4, kind: input, shape index: {}]
  %s5 = inlined_call_operand.vmem [shape: f32[32,128], index: 5, kind: input, shape index: {}]
  %s6 = inlined_call_operand.vmem [shape: f32[1,128], index: 6, kind: input, shape index: {}]
  %s7 = inlined_call_operand.hbm [shape: f32[32,128], index: 7, kind: input, shape index: {}]
  %s8 = inlined_call_operand.vmem [shape: f32[1,128], index: 8, kind: input, shape index: {}]
  %s9 = inlined_call_operand.vmem [shape: f32[8,128], index: 9, kind: output, shape index: {}]
  %s10 = sld [smem:[#allocation0]]
  $region50: #{_forward_impl.1} parent=0
    _
  %s12 = ssub.s32 1, %s10
  %s13 = scalar_select 0, %s12, %s10
  $region1: #{_forward_impl.1} parent=0
    #allocation2 [shape = 'u8[16384]{0}', space=vmem, size = 0x4000, scoped, tag = 'input window, operand 7, single buffered']
    #allocation3 [shape = 's32[1]{0}', space=sflag, size = 0x4, scoped, tag = 'scoped memory for _forward_impl.1']
    %14 = vsyncpa [#allocation3], 0
    // Predicated region
    $region2: #{_forward_impl.1} parent=1 // pred_check
      _
    $region3: #{_forward_impl.1} parent=1 // pred_check_branch
      %16 = sbr.rel (0) target = $region5
    $region4: #{_forward_impl.1} parent=1 // pred_region
      _
    $region5: #{_forward_impl.1} parent=1 // pred_fallthru
      _
    // Predicated region
    $region6: #{_forward_impl.1} parent=1 // pred_check
      _
    $region7: #{_forward_impl.1} parent=1 // pred_check_branch
      %18 = sbr.rel (0) target = $region9
    $region8: #{_forward_impl.1} parent=1 // pred_region
      _
    $region9: #{_forward_impl.1} parent=1 // pred_fallthru
      _
    // Predicated region
    $region10: #{_forward_impl.1} parent=1 // pred_check
      _
    $region11: #{_forward_impl.1} parent=1 // pred_check_branch
      %20 = sbr.rel (0) target = $region13
    $region12: #{_forward_impl.1} parent=1 // pred_region
      _
    $region13: #{_forward_impl.1} parent=1 // pred_fallthru
      _
    // Predicated region
    $region14: #{_forward_impl.1} parent=1 // pred_check
      _
    $region15: #{_forward_impl.1} parent=1 // pred_check_branch
      %22 = sbr.rel (0) target = $region17
    $region16: #{_forward_impl.1} parent=1 // pred_region
      _
    $region17: #{_forward_impl.1} parent=1 // pred_fallthru
      _
    // Predicated region
    $region18: #{_forward_impl.1} parent=1 // pred_check
      _
    $region19: #{_forward_impl.1} parent=1 // pred_check_branch
      %24 = sbr.rel (0) target = $region21
    $region20: #{_forward_impl.1} parent=1 // pred_region
      _
    $region21: #{_forward_impl.1} parent=1 // pred_fallthru
      _
    // Predicated region
    $region22: #{_forward_impl.1} parent=1 // pred_check
      _
    $region23: #{_forward_impl.1} parent=1 // pred_check_branch
      %26 = sbr.rel (0) target = $region25
    $region24: #{_forward_impl.1} parent=1 // pred_region
      _
    $region25: #{_forward_impl.1} parent=1 // pred_fallthru
      _
    // Predicated region
    $region26: #{_forward_impl.1} parent=1 // pred_check
      _
    $region27: #{_forward_impl.1} parent=1 // pred_check_branch
      %28 = sbr.rel (0) target = $region29
    $region28: #{_forward_impl.1} parent=1 // pred_region
      _
    $region29: #{_forward_impl.1} parent=1 // pred_fallthru
      _
    // Predicated region
    $region30: #{_forward_impl.1} parent=1 // pred_check
      _
    $region31: #{_forward_impl.1} parent=1 // pred_check_branch
      %30 = sbr.rel (0) target = $region33
    $region32: #{_forward_impl.1} parent=1 // pred_region
      %s32 = ssub.s32 512, 512
      %33 = vsyncadd [#allocation3], %s32
      %s34 = sshll.u32 [#allocation2], 4
      %s35 = int_to_ptr.vmem [resolvable:$true] %s34
      %40 = dma.hbm_to_vmem [thread:$0]  %s7, 512, %s35, [#allocation3], 128, 128, 8
    $region33: #{_forward_impl.1} parent=1 // pred_fallthru
      _
    // Predicated region
    $region34: #{_forward_impl.1} parent=1 // pred_check
      _
    $region35: #{_forward_impl.1} parent=1 // pred_check_branch
      %42 = sbr.rel (0) target = $region37
    $region36: #{_forward_impl.1} parent=1 // pred_region
      _
    $region37: #{_forward_impl.1} parent=1 // pred_fallthru
      _
    // Predicated region
    $region38: #{_forward_impl.1} parent=1 // pred_check
      _
    $region39: #{_forward_impl.1} parent=1 // pred_check_branch
      %44 = sbr.rel (0) target = $region41
    $region40: #{_forward_impl.1} parent=1 // pred_region
      %45 = dma.done [#allocation3], 512
    $region41: #{_forward_impl.1} parent=1 // pred_fallthru
      _
    %v46 = vld [vmem:[%s0] sm:$0xff]
    %v47 = vld [vmem:[%s0 + $0x8] sm:$0xff]
    %v48 = vld [vmem:[%s0 + $0x10] sm:$0xff]
    %v49 = vld [vmem:[%s0 + $0x18] sm:$0xff]
    %v50 = vld [vmem:[%s0 + $0x20] sm:$0xff]
    %v51 = vld [vmem:[%s0 + $0x28] sm:$0xff]
    %v52 = vld [vmem:[%s0 + $0x30] sm:$0xff]
    %v53 = vld [vmem:[%s0 + $0x38] sm:$0xff]
    %v54 = vld [vmem:[%s1] sm:$0xf]
    %v55 = vld [vmem:[%s2] sm:$0xff]
    %v56 = vld [vmem:[%s2 + $0x8] sm:$0xff]
    %v57 = vld [vmem:[%s2 + $0x10] sm:$0xff]
    %v58 = vld [vmem:[%s2 + $0x18] sm:$0xff]
    %v59 = vld [vmem:[%s3] sm:$0x1]
    %v61 = vlaneseq
    %v62 = vshrl.u32 %v61, 7
    %v63 = vsub.s32 0, %v62
    %v64 = vrot.slane %v59, %v63
    %vm66 = vcmask 31744
    %v68 = vsel %vm66, %v46, 0
    %v71 = vsel %vm66, %v47, 0
    %v74 = vsel %vm66, %v48, 0
    %v77 = vsel %vm66, %v49, 0
    %v80 = vsel %vm66, %v50, 0
    %v83 = vsel %vm66, %v51, 0
    %v86 = vsel %vm66, %v52, 0
    %v89 = vsel %vm66, %v53, 0
    %vm91 = vcmask 1043456
    %v93 = vsel %vm91, %v54, 0
    %95 = vmatprep.subr.mxu0 0.0
    %96 = vmatpush1.msra.mxu0 0.0
    %97 = vmatprep.subr.mxu0 0.0
    %98 = vmatpush1.msra.mxu0 0.0
    %99 = vmatprep.subr.mxu0 0.0
    %100 = vmatpush1.msra.mxu0 0.0
    %101 = vmatprep.subr.mxu0 0.0
    %102 = vmatpush1.msra.mxu0 0.0
    %103 = vmatprep.subr.mxu0 0.0
    %104 = vmatpush1.msra.mxu0 0.0
    %105 = vmatprep.subr.mxu0 0.0
    %106 = vmatpush1.msra.mxu0 0.0
    %107 = vmatprep.subr.mxu0 0.0
    %108 = vmatpush1.msra.mxu0 0.0
    %109 = vmatprep.subr.mxu0 0.0
    %110 = vmatpush1.msra.mxu0 0.0
    %111 = vmatprep.subr.mxu0 0.0
    %112 = vmatpush1.msra.mxu0 0.0
    %113 = vmatprep.subr.mxu0 0.0
    %114 = vmatpush1.msra.mxu0 0.0
    %115 = vmatprep.subr.mxu0 0.0
    %116 = vmatpush1.msra.mxu0 0.0
    %117 = vmatprep.subr.mxu0 0.0
    %118 = vmatpush1.msra.mxu0 0.0
    %119 = vmatprep.subr.mxu0 0.0
    %120 = vmatpush1.msra.mxu0 0.0
    %121 = vmatprep.subr.mxu0 0.0
    %122 = vmatpush1.msra.mxu0 0.0
    %123 = vmatprep.subr.mxu0 0.0
    %124 = vmatpush1.msra.mxu0 0.0
    %125 = vmatprep.subr.mxu0 0.0
    %126 = vmatpush1.msra.mxu0 %v93
    %127 = vmatprep.subr.mxu0 0.0
    %128 = vmatpush2.msra.mxu0 0.0
    %129 = vmatprep.subr.mxu0 0.0
    %130 = vmatpush2.msra.mxu0 0.0
    %131 = vmatprep.subr.mxu0 0.0
    %132 = vmatpush2.msra.mxu0 0.0
    %133 = vmatprep.subr.mxu0 0.0
    %134 = vmatpush2.msra.mxu0 0.0
    %135 = vmatprep.subr.mxu0 0.0
    %136 = vmatpush2.msra.mxu0 0.0
    %137 = vmatprep.subr.mxu0 0.0
    %138 = vmatpush2.msra.mxu0 0.0
    %139 = vmatprep.subr.mxu0 0.0
    %140 = vmatpush2.msra.mxu0 0.0
    %141 = vmatprep.subr.mxu0 0.0
    %142 = vmatpush2.msra.mxu0 0.0
    %143 = vmatprep.subr.mxu0 0.0
    %144 = vmatpush2.msra.mxu0 0.0
    %145 = vmatprep.subr.mxu0 0.0
    %146 = vmatpush2.msra.mxu0 0.0
    %147 = vmatprep.subr.mxu0 0.0
    %148 = vmatpush2.msra.mxu0 0.0
    %149 = vmatprep.subr.mxu0 0.0
    %150 = vmatpush2.msra.mxu0 0.0
    %151 = vmatprep.subr.mxu0 0.0
    %152 = vmatpush2.msra.mxu0 0.0
    %153 = vmatprep.subr.mxu0 0.0
    %154 = vmatpush2.msra.mxu0 0.0
    %155 = vmatprep.subr.mxu0 0.0
    %156 = vmatpush2.msra.mxu0 0.0
    %157 = vmatprep.subr.mxu0 0.0
    %158 = vmatpush2.msra.mxu0 0.0
    %159 = vmatprep.mubr.f32.mxu0 0.0
    %160 = vmatmul.mubr.f32.gmra.mxu0 %v68
    %v161 = vpop.f32.mrf.mxu0
    %v162 = vadd.f32 %v64, %v161
    %v163 = vpop.f32.mrf.mxu0
    %164 = vmatprep.mubr.f32.mxu0 0.0
    %165 = vmatmul.mubr.f32.gmra.mxu0 %v71
    %v166 = vpop.f32.mrf.mxu0
    %v167 = vadd.f32 %v64, %v166
    %v168 = vpop.f32.mrf.mxu0
    %169 = vmatprep.mubr.f32.mxu0 0.0
    %170 = vmatmul.mubr.f32.gmra.mxu0 %v74
    %v171 = vpop.f32.mrf.mxu0
    %v172 = vadd.f32 %v64, %v171
    %v173 = vpop.f32.mrf.mxu0
    %174 = vmatprep.mubr.f32.mxu0 0.0
    %175 = vmatmul.mubr.f32.gmra.mxu0 %v77
    %v176 = vpop.f32.mrf.mxu0
    %v177 = vadd.f32 %v64, %v176
    %v178 = vpop.f32.mrf.mxu0
    %179 = vmatprep.mubr.f32.mxu0 0.0
    %180 = vmatmul.mubr.f32.gmra.mxu0 %v80
    %v181 = vpop.f32.mrf.mxu0
    %v182 = vadd.f32 %v64, %v181
    %v183 = vpop.f32.mrf.mxu0
    %184 = vmatprep.mubr.f32.mxu0 0.0
    %185 = vmatmul.mubr.f32.gmra.mxu0 %v83
    %v186 = vpop.f32.mrf.mxu0
    %v187 = vadd.f32 %v64, %v186
    %v188 = vpop.f32.mrf.mxu0
    %189 = vmatprep.mubr.f32.mxu0 0.0
    %190 = vmatmul.mubr.f32.gmra.mxu0 %v86
    %v191 = vpop.f32.mrf.mxu0
    %v192 = vadd.f32 %v64, %v191
    %v193 = vpop.f32.mrf.mxu0
    %194 = vmatprep.mubr.f32.mxu0 0.0
    %195 = vmatmul.mubr.f32.gmra.mxu0 %v89
    %v196 = vpop.f32.mrf.mxu0
    %v197 = vadd.f32 %v64, %v196
    %v198 = vpop.f32.mrf.mxu0
    %199 = vdwg.mxu0
    %vm200 = vcmask 261120
    %v202 = vsel %vm200, 0.0, 0
    %204 = vmatprep.subr.mxu0 0.0
    %205 = vmatpush1.msra.mxu0 0.0
    %206 = vmatprep.subr.mxu0 0.0
    %207 = vmatpush1.msra.mxu0 0.0
    %208 = vmatprep.subr.mxu0 0.0
    %209 = vmatpush1.msra.mxu0 0.0
    %210 = vmatprep.subr.mxu0 0.0
    %211 = vmatpush1.msra.mxu0 0.0
    %212 = vmatprep.subr.mxu0 0.0
    %213 = vmatpush1.msra.mxu0 0.0
    %214 = vmatprep.subr.mxu0 0.0
    %215 = vmatpush1.msra.mxu0 0.0
    %216 = vmatprep.subr.mxu0 0.0
    %217 = vmatpush1.msra.mxu0 0.0
    %218 = vmatprep.subr.mxu0 0.0
    %219 = vmatpush1.msra.mxu0 0.0
    %220 = vmatprep.subr.mxu0 0.0
    %221 = vmatpush1.msra.mxu0 0.0
    %222 = vmatprep.subr.mxu0 0.0
    %223 = vmatpush1.msra.mxu0 0.0
    %224 = vmatprep.subr.mxu0 0.0
    %225 = vmatpush1.msra.mxu0 0.0
    %226 = vmatprep.subr.mxu0 0.0
    %227 = vmatpush1.msra.mxu0 0.0
    %228 = vmatprep.subr.mxu0 0.0
    %229 = vmatpush1.msra.mxu0 %v58
    %230 = vmatprep.subr.mxu0 0.0
    %231 = vmatpush1.msra.mxu0 %v57
    %232 = vmatprep.subr.mxu0 0.0
    %233 = vmatpush1.msra.mxu0 %v56
    %234 = vmatprep.subr.mxu0 0.0
    %235 = vmatpush1.msra.mxu0 %v55
    %236 = vmatprep.subr.mxu0 0.0
    %237 = vmatpush2.msra.mxu0 0.0
    %238 = vmatprep.subr.mxu0 0.0
    %239 = vmatpush2.msra.mxu0 0.0
    %240 = vmatprep.subr.mxu0 0.0
    %241 = vmatpush2.msra.mxu0 0.0
    %242 = vmatprep.subr.mxu0 0.0
    %243 = vmatpush2.msra.mxu0 0.0
    %244 = vmatprep.subr.mxu0 0.0
    %245 = vmatpush2.msra.mxu0 0.0
    %246 = vmatprep.subr.mxu0 0.0
    %247 = vmatpush2.msra.mxu0 0.0
    %248 = vmatprep.subr.mxu0 0.0
    %249 = vmatpush2.msra.mxu0 0.0
    %250 = vmatprep.subr.mxu0 0.0
    %251 = vmatpush2.msra.mxu0 0.0
    %252 = vmatprep.subr.mxu0 0.0
    %253 = vmatpush2.msra.mxu0 0.0
    %254 = vmatprep.subr.mxu0 0.0
    %255 = vmatpush2.msra.mxu0 0.0
    %256 = vmatprep.subr.mxu0 0.0
    %257 = vmatpush2.msra.mxu0 0.0
    %258 = vmatprep.subr.mxu0 0.0
    %259 = vmatpush2.msra.mxu0 0.0
    %260 = vmatprep.subr.mxu0 0.0
    %261 = vmatpush2.msra.mxu0 0.0
    %262 = vmatprep.subr.mxu0 0.0
    %263 = vmatpush2.msra.mxu0 0.0
    %264 = vmatprep.subr.mxu0 0.0
    %265 = vmatpush2.msra.mxu0 0.0
    %266 = vmatprep.subr.mxu0 0.0
    %267 = vmatpush2.msra.mxu0 0.0
    %268 = vmatprep.mubr.f32.mxu0 0.0
    %269 = vmatmul.mubr.f32.gmra.mxu0 %v202
    %v270 = vpop.f32.mrf.mxu0
    %v271 = vadd.f32 0.0, %v270
    %v272 = vpop.f32.mrf.mxu0
    %273 = vdwg.mxu0
    %v274 = vadd.f32 %v162, %v271
    %v275 = vxor.u32 %v274, 2147483648
    %v276 = vmul.f32 %v275, 1.442695
    %v277 = vpow.pop %v276
    %v278 = vadd.f32 %v277, 1.0
    %v279 = vrcp.pop %v278
    %v280 = vmul.f32 1.0, %v279
    %v281 = vtanh.pop %v274
    %v282 = vmul.f32 %v280, 0.0
    %284 = vrot.lane.b32.xlu0 %v281, 64
    %v285 = vpop.permute.xlu0 %284
    %v287 = vmul.f32 %v280, %v285
    %289 = vrot.lane.b32.xlu0 %v287, 32
    %v290 = vpop.permute.xlu0 %289
    %v292 = vadd.f32 %v282, %v290
    %v293 = vtanh.pop %v292
    %295 = vrot.lane.b32.xlu0 %v293, 64
    %v296 = vpop.permute.xlu0 %295
    %v298 = vmul.f32 %v280, %v296
    %300 = vrot.lane.b32.xlu0 %v298, 32
    %v301 = vpop.permute.xlu0 %300
    %v302 = vsel %vm200, %v301, 0
    %304 = vmatprep.subr.mxu0 0.0
    %305 = vmatpush1.msra.mxu0 0.0
    %306 = vmatprep.subr.mxu0 0.0
    %307 = vmatpush1.msra.mxu0 0.0
    %308 = vmatprep.subr.mxu0 0.0
    %309 = vmatpush1.msra.mxu0 0.0
    %310 = vmatprep.subr.mxu0 0.0
    %311 = vmatpush1.msra.mxu0 0.0
    %312 = vmatprep.subr.mxu0 0.0
    %313 = vmatpush1.msra.mxu0 0.0
    %314 = vmatprep.subr.mxu0 0.0
    %315 = vmatpush1.msra.mxu0 0.0
    %316 = vmatprep.subr.mxu0 0.0
    %317 = vmatpush1.msra.mxu0 0.0
    %318 = vmatprep.subr.mxu0 0.0
    %319 = vmatpush1.msra.mxu0 0.0
    %320 = vmatprep.subr.mxu0 0.0
    %321 = vmatpush1.msra.mxu0 0.0
    %322 = vmatprep.subr.mxu0 0.0
    %323 = vmatpush1.msra.mxu0 0.0
    %324 = vmatprep.subr.mxu0 0.0
    %325 = vmatpush1.msra.mxu0 0.0
    %326 = vmatprep.subr.mxu0 0.0
    %327 = vmatpush1.msra.mxu0 0.0
    %328 = vmatprep.subr.mxu0 0.0
    %329 = vmatpush1.msra.mxu0 %v58
    %330 = vmatprep.subr.mxu0 0.0
    %331 = vmatpush1.msra.mxu0 %v57
    %332 = vmatprep.subr.mxu0 0.0
    %333 = vmatpush1.msra.mxu0 %v56
    %334 = vmatprep.subr.mxu0 0.0
    %335 = vmatpush1.msra.mxu0 %v55
    %336 = vmatprep.subr.mxu0 0.0
    %337 = vmatpush2.msra.mxu0 0.0
    %338 = vmatprep.subr.mxu0 0.0
    %339 = vmatpush2.msra.mxu0 0.0
    %340 = vmatprep.subr.mxu0 0.0
    %341 = vmatpush2.msra.mxu0 0.0
    %342 = vmatprep.subr.mxu0 0.0
    %343 = vmatpush2.msra.mxu0 0.0
    %344 = vmatprep.subr.mxu0 0.0
    %345 = vmatpush2.msra.mxu0 0.0
    %346 = vmatprep.subr.mxu0 0.0
    %347 = vmatpush2.msra.mxu0 0.0
    %348 = vmatprep.subr.mxu0 0.0
    %349 = vmatpush2.msra.mxu0 0.0
    %350 = vmatprep.subr.mxu0 0.0
    %351 = vmatpush2.msra.mxu0 0.0
    %352 = vmatprep.subr.mxu0 0.0
    %353 = vmatpush2.msra.mxu0 0.0
    %354 = vmatprep.subr.mxu0 0.0
    %355 = vmatpush2.msra.mxu0 0.0
    %356 = vmatprep.subr.mxu0 0.0
    %357 = vmatpush2.msra.mxu0 0.0
    %358 = vmatprep.subr.mxu0 0.0
    %359 = vmatpush2.msra.mxu0 0.0
    %360 = vmatprep.subr.mxu0 0.0
    %361 = vmatpush2.msra.mxu0 0.0
    %362 = vmatprep.subr.mxu0 0.0
    %363 = vmatpush2.msra.mxu0 0.0
    %364 = vmatprep.subr.mxu0 0.0
    %365 = vmatpush2.msra.mxu0 0.0
    %366 = vmatprep.subr.mxu0 0.0
    %367 = vmatpush2.msra.mxu0 0.0
    %368 = vmatprep.mubr.f32.mxu0 0.0
    %369 = vmatmul.mubr.f32.gmra.mxu0 %v302
    %v370 = vpop.f32.mrf.mxu0
    %v371 = vadd.f32 0.0, %v370
    %v372 = vpop.f32.mrf.mxu0
    %373 = vdwg.mxu0
    %v374 = vadd.f32 %v167, %v371
    %v375 = vxor.u32 %v374, 2147483648
    %v376 = vmul.f32 %v375, 1.442695
    %v377 = vpow.pop %v376
    %v378 = vadd.f32 %v377, 1.0
    %v379 = vrcp.pop %v378
    %v380 = vmul.f32 1.0, %v379
    %v381 = vtanh.pop %v374
    %v382 = vmul.f32 %v380, %v292
    %384 = vrot.lane.b32.xlu0 %v381, 64
    %v385 = vpop.permute.xlu0 %384
    %v387 = vmul.f32 %v380, %v385
    %389 = vrot.lane.b32.xlu0 %v387, 32
    %v390 = vpop.permute.xlu0 %389
    %v392 = vadd.f32 %v382, %v390
    %v393 = vtanh.pop %v392
    %395 = vrot.lane.b32.xlu0 %v393, 64
    %v396 = vpop.permute.xlu0 %395
    %v398 = vmul.f32 %v380, %v396
    %400 = vrot.lane.b32.xlu0 %v398, 32
    %v401 = vpop.permute.xlu0 %400
    %v402 = vsel %vm200, %v401, 0
    %404 = vmatprep.subr.mxu0 0.0
    %405 = vmatpush1.msra.mxu0 0.0
    %406 = vmatprep.subr.mxu0 0.0
    %407 = vmatpush1.msra.mxu0 0.0
    %408 = vmatprep.subr.mxu0 0.0
    %409 = vmatpush1.msra.mxu0 0.0
    %410 = vmatprep.subr.mxu0 0.0
    %411 = vmatpush1.msra.mxu0 0.0
    %412 = vmatprep.subr.mxu0 0.0
    %413 = vmatpush1.msra.mxu0 0.0
    %414 = vmatprep.subr.mxu0 0.0
    %415 = vmatpush1.msra.mxu0 0.0
    %416 = vmatprep.subr.mxu0 0.0
    %417 = vmatpush1.msra.mxu0 0.0
    %418 = vmatprep.subr.mxu0 0.0
    %419 = vmatpush1.msra.mxu0 0.0
    %420 = vmatprep.subr.mxu0 0.0
    %421 = vmatpush1.msra.mxu0 0.0
    %422 = vmatprep.subr.mxu0 0.0
    %423 = vmatpush1.msra.mxu0 0.0
    %424 = vmatprep.subr.mxu0 0.0
    %425 = vmatpush1.msra.mxu0 0.0
    %426 = vmatprep.subr.mxu0 0.0
    %427 = vmatpush1.msra.mxu0 0.0
    %428 = vmatprep.subr.mxu0 0.0
    %429 = vmatpush1.msra.mxu0 %v58
    %430 = vmatprep.subr.mxu0 0.0
    %431 = vmatpush1.msra.mxu0 %v57
    %432 = vmatprep.subr.mxu0 0.0
    %433 = vmatpush1.msra.mxu0 %v56
    %434 = vmatprep.subr.mxu0 0.0
    %435 = vmatpush1.msra.mxu0 %v55
    %436 = vmatprep.subr.mxu0 0.0
    %437 = vmatpush2.msra.mxu0 0.0
    %438 = vmatprep.subr.mxu0 0.0
    %439 = vmatpush2.msra.mxu0 0.0
    %440 = vmatprep.subr.mxu0 0.0
    %441 = vmatpush2.msra.mxu0 0.0
    %442 = vmatprep.subr.mxu0 0.0
    %443 = vmatpush2.msra.mxu0 0.0
    %444 = vmatprep.subr.mxu0 0.0
    %445 = vmatpush2.msra.mxu0 0.0
    %446 = vmatprep.subr.mxu0 0.0
    %447 = vmatpush2.msra.mxu0 0.0
    %448 = vmatprep.subr.mxu0 0.0
    %449 = vmatpush2.msra.mxu0 0.0
    %450 = vmatprep.subr.mxu0 0.0
    %451 = vmatpush2.msra.mxu0 0.0
    %452 = vmatprep.subr.mxu0 0.0
    %453 = vmatpush2.msra.mxu0 0.0
    %454 = vmatprep.subr.mxu0 0.0
    %455 = vmatpush2.msra.mxu0 0.0
    %456 = vmatprep.subr.mxu0 0.0
    %457 = vmatpush2.msra.mxu0 0.0
    %458 = vmatprep.subr.mxu0 0.0
    %459 = vmatpush2.msra.mxu0 0.0
    %460 = vmatprep.subr.mxu0 0.0
    %461 = vmatpush2.msra.mxu0 0.0
    %462 = vmatprep.subr.mxu0 0.0
    %463 = vmatpush2.msra.mxu0 0.0
    %464 = vmatprep.subr.mxu0 0.0
    %465 = vmatpush2.msra.mxu0 0.0
    %466 = vmatprep.subr.mxu0 0.0
    %467 = vmatpush2.msra.mxu0 0.0
    %468 = vmatprep.mubr.f32.mxu0 0.0
    %469 = vmatmul.mubr.f32.gmra.mxu0 %v402
    %v470 = vpop.f32.mrf.mxu0
    %v471 = vadd.f32 0.0, %v470
    %v472 = vpop.f32.mrf.mxu0
    %473 = vdwg.mxu0
    %v474 = vadd.f32 %v172, %v471
    %v475 = vxor.u32 %v474, 2147483648
    %v476 = vmul.f32 %v475, 1.442695
    %v477 = vpow.pop %v476
    %v478 = vadd.f32 %v477, 1.0
    %v479 = vrcp.pop %v478
    %v480 = vmul.f32 1.0, %v479
    %v481 = vtanh.pop %v474
    %v482 = vmul.f32 %v480, %v392
    %484 = vrot.lane.b32.xlu0 %v481, 64
    %v485 = vpop.permute.xlu0 %484
    %v487 = vmul.f32 %v480, %v485
    %489 = vrot.lane.b32.xlu0 %v487, 32
    %v490 = vpop.permute.xlu0 %489
    %v492 = vadd.f32 %v482, %v490
    %v493 = vtanh.pop %v492
    %495 = vrot.lane.b32.xlu0 %v493, 64
    %v496 = vpop.permute.xlu0 %495
    %v498 = vmul.f32 %v480, %v496
    %500 = vrot.lane.b32.xlu0 %v498, 32
    %v501 = vpop.permute.xlu0 %500
    %v502 = vsel %vm200, %v501, 0
    %504 = vmatprep.subr.mxu0 0.0
    %505 = vmatpush1.msra.mxu0 0.0
    %506 = vmatprep.subr.mxu0 0.0
    %507 = vmatpush1.msra.mxu0 0.0
    %508 = vmatprep.subr.mxu0 0.0
    %509 = vmatpush1.msra.mxu0 0.0
    %510 = vmatprep.subr.mxu0 0.0
    %511 = vmatpush1.msra.mxu0 0.0
    %512 = vmatprep.subr.mxu0 0.0
    %513 = vmatpush1.msra.mxu0 0.0
    %514 = vmatprep.subr.mxu0 0.0
    %515 = vmatpush1.msra.mxu0 0.0
    %516 = vmatprep.subr.mxu0 0.0
    %517 = vmatpush1.msra.mxu0 0.0
    %518 = vmatprep.subr.mxu0 0.0
    %519 = vmatpush1.msra.mxu0 0.0
    %520 = vmatprep.subr.mxu0 0.0
    %521 = vmatpush1.msra.mxu0 0.0
    %522 = vmatprep.subr.mxu0 0.0
    %523 = vmatpush1.msra.mxu0 0.0
    %524 = vmatprep.subr.mxu0 0.0
    %525 = vmatpush1.msra.mxu0 0.0
    %526 = vmatprep.subr.mxu0 0.0
    %527 = vmatpush1.msra.mxu0 0.0
    %528 = vmatprep.subr.mxu0 0.0
    %529 = vmatpush1.msra.mxu0 %v58
    %530 = vmatprep.subr.mxu0 0.0
    %531 = vmatpush1.msra.mxu0 %v57
    %532 = vmatprep.subr.mxu0 0.0
    %533 = vmatpush1.msra.mxu0 %v56
    %534 = vmatprep.subr.mxu0 0.0
    %535 = vmatpush1.msra.mxu0 %v55
    %536 = vmatprep.subr.mxu0 0.0
    %537 = vmatpush2.msra.mxu0 0.0
    %538 = vmatprep.subr.mxu0 0.0
    %539 = vmatpush2.msra.mxu0 0.0
    %540 = vmatprep.subr.mxu0 0.0
    %541 = vmatpush2.msra.mxu0 0.0
    %542 = vmatprep.subr.mxu0 0.0
    %543 = vmatpush2.msra.mxu0 0.0
    %544 = vmatprep.subr.mxu0 0.0
    %545 = vmatpush2.msra.mxu0 0.0
    %546 = vmatprep.subr.mxu0 0.0
    %547 = vmatpush2.msra.mxu0 0.0
    %548 = vmatprep.subr.mxu0 0.0
    %549 = vmatpush2.msra.mxu0 0.0
    %550 = vmatprep.subr.mxu0 0.0
    %551 = vmatpush2.msra.mxu0 0.0
    %552 = vmatprep.subr.mxu0 0.0
    %553 = vmatpush2.msra.mxu0 0.0
    %554 = vmatprep.subr.mxu0 0.0
    %555 = vmatpush2.msra.mxu0 0.0
    %556 = vmatprep.subr.mxu0 0.0
    %557 = vmatpush2.msra.mxu0 0.0
    %558 = vmatprep.subr.mxu0 0.0
    %559 = vmatpush2.msra.mxu0 0.0
    %560 = vmatprep.subr.mxu0 0.0
    %561 = vmatpush2.msra.mxu0 0.0
    %562 = vmatprep.subr.mxu0 0.0
    %563 = vmatpush2.msra.mxu0 0.0
    %564 = vmatprep.subr.mxu0 0.0
    %565 = vmatpush2.msra.mxu0 0.0
    %566 = vmatprep.subr.mxu0 0.0
    %567 = vmatpush2.msra.mxu0 0.0
    %568 = vmatprep.mubr.f32.mxu0 0.0
    %569 = vmatmul.mubr.f32.gmra.mxu0 %v502
    %v570 = vpop.f32.mrf.mxu0
    %v571 = vadd.f32 0.0, %v570
    %v572 = vpop.f32.mrf.mxu0
    %573 = vdwg.mxu0
    %v574 = vadd.f32 %v177, %v571
    %v575 = vxor.u32 %v574, 2147483648
    %v576 = vmul.f32 %v575, 1.442695
    %v577 = vpow.pop %v576
    %v578 = vadd.f32 %v577, 1.0
    %v579 = vrcp.pop %v578
    %v580 = vmul.f32 1.0, %v579
    %v581 = vtanh.pop %v574
    %v582 = vmul.f32 %v580, %v492
    %584 = vrot.lane.b32.xlu0 %v581, 64
    %v585 = vpop.permute.xlu0 %584
    %v587 = vmul.f32 %v580, %v585
    %589 = vrot.lane.b32.xlu0 %v587, 32
    %v590 = vpop.permute.xlu0 %589
    %v592 = vadd.f32 %v582, %v590
    %v593 = vtanh.pop %v592
    %595 = vrot.lane.b32.xlu0 %v593, 64
    %v596 = vpop.permute.xlu0 %595
    %v598 = vmul.f32 %v580, %v596
    %600 = vrot.lane.b32.xlu0 %v598, 32
    %v601 = vpop.permute.xlu0 %600
    %v602 = vsel %vm200, %v601, 0
    %604 = vmatprep.subr.mxu0 0.0
    %605 = vmatpush1.msra.mxu0 0.0
    %606 = vmatprep.subr.mxu0 0.0
    %607 = vmatpush1.msra.mxu0 0.0
    %608 = vmatprep.subr.mxu0 0.0
    %609 = vmatpush1.msra.mxu0 0.0
    %610 = vmatprep.subr.mxu0 0.0
    %611 = vmatpush1.msra.mxu0 0.0
    %612 = vmatprep.subr.mxu0 0.0
    %613 = vmatpush1.msra.mxu0 0.0
    %614 = vmatprep.subr.mxu0 0.0
    %615 = vmatpush1.msra.mxu0 0.0
    %616 = vmatprep.subr.mxu0 0.0
    %617 = vmatpush1.msra.mxu0 0.0
    %618 = vmatprep.subr.mxu0 0.0
    %619 = vmatpush1.msra.mxu0 0.0
    %620 = vmatprep.subr.mxu0 0.0
    %621 = vmatpush1.msra.mxu0 0.0
    %622 = vmatprep.subr.mxu0 0.0
    %623 = vmatpush1.msra.mxu0 0.0
    %624 = vmatprep.subr.mxu0 0.0
    %625 = vmatpush1.msra.mxu0 0.0
    %626 = vmatprep.subr.mxu0 0.0
    %627 = vmatpush1.msra.mxu0 0.0
    %628 = vmatprep.subr.mxu0 0.0
    %629 = vmatpush1.msra.mxu0 %v58
    %630 = vmatprep.subr.mxu0 0.0
    %631 = vmatpush1.msra.mxu0 %v57
    %632 = vmatprep.subr.mxu0 0.0
    %633 = vmatpush1.msra.mxu0 %v56
    %634 = vmatprep.subr.mxu0 0.0
    %635 = vmatpush1.msra.mxu0 %v55
    %636 = vmatprep.subr.mxu0 0.0
    %637 = vmatpush2.msra.mxu0 0.0
    %638 = vmatprep.subr.mxu0 0.0
    %639 = vmatpush2.msra.mxu0 0.0
    %640 = vmatprep.subr.mxu0 0.0
    %641 = vmatpush2.msra.mxu0 0.0
    %642 = vmatprep.subr.mxu0 0.0
    %643 = vmatpush2.msra.mxu0 0.0
    %644 = vmatprep.subr.mxu0 0.0
    %645 = vmatpush2.msra.mxu0 0.0
    %646 = vmatprep.subr.mxu0 0.0
    %647 = vmatpush2.msra.mxu0 0.0
    %648 = vmatprep.subr.mxu0 0.0
    %649 = vmatpush2.msra.mxu0 0.0
    %650 = vmatprep.subr.mxu0 0.0
    %651 = vmatpush2.msra.mxu0 0.0
    %652 = vmatprep.subr.mxu0 0.0
    %653 = vmatpush2.msra.mxu0 0.0
    %654 = vmatprep.subr.mxu0 0.0
    %655 = vmatpush2.msra.mxu0 0.0
    %656 = vmatprep.subr.mxu0 0.0
    %657 = vmatpush2.msra.mxu0 0.0
    %658 = vmatprep.subr.mxu0 0.0
    %659 = vmatpush2.msra.mxu0 0.0
    %660 = vmatprep.subr.mxu0 0.0
    %661 = vmatpush2.msra.mxu0 0.0
    %662 = vmatprep.subr.mxu0 0.0
    %663 = vmatpush2.msra.mxu0 0.0
    %664 = vmatprep.subr.mxu0 0.0
    %665 = vmatpush2.msra.mxu0 0.0
    %666 = vmatprep.subr.mxu0 0.0
    %667 = vmatpush2.msra.mxu0 0.0
    %668 = vmatprep.mubr.f32.mxu0 0.0
    %669 = vmatmul.mubr.f32.gmra.mxu0 %v602
    %v670 = vpop.f32.mrf.mxu0
    %v671 = vadd.f32 0.0, %v670
    %v672 = vpop.f32.mrf.mxu0
    %673 = vdwg.mxu0
    %v674 = vadd.f32 %v182, %v671
    %v675 = vxor.u32 %v674, 2147483648
    %v676 = vmul.f32 %v675, 1.442695
    %v677 = vpow.pop %v676
    %v678 = vadd.f32 %v677, 1.0
    %v679 = vrcp.pop %v678
    %v680 = vmul.f32 1.0, %v679
    %v681 = vtanh.pop %v674
    %v682 = vmul.f32 %v680, %v592
    %684 = vrot.lane.b32.xlu0 %v681, 64
    %v685 = vpop.permute.xlu0 %684
    %v687 = vmul.f32 %v680, %v685
    %689 = vrot.lane.b32.xlu0 %v687, 32
    %v690 = vpop.permute.xlu0 %689
    %v692 = vadd.f32 %v682, %v690
    %v693 = vtanh.pop %v692
    %695 = vrot.lane.b32.xlu0 %v693, 64
    %v696 = vpop.permute.xlu0 %695
    %v698 = vmul.f32 %v680, %v696
    %700 = vrot.lane.b32.xlu0 %v698, 32
    %v701 = vpop.permute.xlu0 %700
    %v702 = vsel %vm200, %v701, 0
    %704 = vmatprep.subr.mxu0 0.0
    %705 = vmatpush1.msra.mxu0 0.0
    %706 = vmatprep.subr.mxu0 0.0
    %707 = vmatpush1.msra.mxu0 0.0
    %708 = vmatprep.subr.mxu0 0.0
    %709 = vmatpush1.msra.mxu0 0.0
    %710 = vmatprep.subr.mxu0 0.0
    %711 = vmatpush1.msra.mxu0 0.0
    %712 = vmatprep.subr.mxu0 0.0
    %713 = vmatpush1.msra.mxu0 0.0
    %714 = vmatprep.subr.mxu0 0.0
    %715 = vmatpush1.msra.mxu0 0.0
    %716 = vmatprep.subr.mxu0 0.0
    %717 = vmatpush1.msra.mxu0 0.0
    %718 = vmatprep.subr.mxu0 0.0
    %719 = vmatpush1.msra.mxu0 0.0
    %720 = vmatprep.subr.mxu0 0.0
    %721 = vmatpush1.msra.mxu0 0.0
    %722 = vmatprep.subr.mxu0 0.0
    %723 = vmatpush1.msra.mxu0 0.0
    %724 = vmatprep.subr.mxu0 0.0
    %725 = vmatpush1.msra.mxu0 0.0
    %726 = vmatprep.subr.mxu0 0.0
    %727 = vmatpush1.msra.mxu0 0.0
    %728 = vmatprep.subr.mxu0 0.0
    %729 = vmatpush1.msra.mxu0 %v58
    %730 = vmatprep.subr.mxu0 0.0
    %731 = vmatpush1.msra.mxu0 %v57
    %732 = vmatprep.subr.mxu0 0.0
    %733 = vmatpush1.msra.mxu0 %v56
    %734 = vmatprep.subr.mxu0 0.0
    %735 = vmatpush1.msra.mxu0 %v55
    %736 = vmatprep.subr.mxu0 0.0
    %737 = vmatpush2.msra.mxu0 0.0
    %738 = vmatprep.subr.mxu0 0.0
    %739 = vmatpush2.msra.mxu0 0.0
    %740 = vmatprep.subr.mxu0 0.0
    %741 = vmatpush2.msra.mxu0 0.0
    %742 = vmatprep.subr.mxu0 0.0
    %743 = vmatpush2.msra.mxu0 0.0
    %744 = vmatprep.subr.mxu0 0.0
    %745 = vmatpush2.msra.mxu0 0.0
    %746 = vmatprep.subr.mxu0 0.0
    %747 = vmatpush2.msra.mxu0 0.0
    %748 = vmatprep.subr.mxu0 0.0
    %749 = vmatpush2.msra.mxu0 0.0
    %750 = vmatprep.subr.mxu0 0.0
    %751 = vmatpush2.msra.mxu0 0.0
    %752 = vmatprep.subr.mxu0 0.0
    %753 = vmatpush2.msra.mxu0 0.0
    %754 = vmatprep.subr.mxu0 0.0
    %755 = vmatpush2.msra.mxu0 0.0
    %756 = vmatprep.subr.mxu0 0.0
    %757 = vmatpush2.msra.mxu0 0.0
    %758 = vmatprep.subr.mxu0 0.0
    %759 = vmatpush2.msra.mxu0 0.0
    %760 = vmatprep.subr.mxu0 0.0
    %761 = vmatpush2.msra.mxu0 0.0
    %762 = vmatprep.subr.mxu0 0.0
    %763 = vmatpush2.msra.mxu0 0.0
    %764 = vmatprep.subr.mxu0 0.0
    %765 = vmatpush2.msra.mxu0 0.0
    %766 = vmatprep.subr.mxu0 0.0
    %767 = vmatpush2.msra.mxu0 0.0
    %768 = vmatprep.mubr.f32.mxu0 0.0
    %769 = vmatmul.mubr.f32.gmra.mxu0 %v702
    %v770 = vpop.f32.mrf.mxu0
    %v771 = vadd.f32 0.0, %v770
    %v772 = vpop.f32.mrf.mxu0
    %773 = vdwg.mxu0
    %v774 = vadd.f32 %v187, %v771
    %v775 = vxor.u32 %v774, 2147483648
    %v776 = vmul.f32 %v775, 1.442695
    %v777 = vpow.pop %v776
    %v778 = vadd.f32 %v777, 1.0
    %v779 = vrcp.pop %v778
    %v780 = vmul.f32 1.0, %v779
    %v781 = vtanh.pop %v774
    %v782 = vmul.f32 %v780, %v692
    %784 = vrot.lane.b32.xlu0 %v781, 64
    %v785 = vpop.permute.xlu0 %784
    %v787 = vmul.f32 %v780, %v785
    %789 = vrot.lane.b32.xlu0 %v787, 32
    %v790 = vpop.permute.xlu0 %789
    %v792 = vadd.f32 %v782, %v790
    %v793 = vtanh.pop %v792
    %795 = vrot.lane.b32.xlu0 %v793, 64
    %v796 = vpop.permute.xlu0 %795
    %v798 = vmul.f32 %v780, %v796
    %800 = vrot.lane.b32.xlu0 %v798, 32
    %v801 = vpop.permute.xlu0 %800
    %v802 = vsel %vm200, %v801, 0
    %804 = vmatprep.subr.mxu0 0.0
    %805 = vmatpush1.msra.mxu0 0.0
    %806 = vmatprep.subr.mxu0 0.0
    %807 = vmatpush1.msra.mxu0 0.0
    %808 = vmatprep.subr.mxu0 0.0
    %809 = vmatpush1.msra.mxu0 0.0
    %810 = vmatprep.subr.mxu0 0.0
    %811 = vmatpush1.msra.mxu0 0.0
    %812 = vmatprep.subr.mxu0 0.0
    %813 = vmatpush1.msra.mxu0 0.0
    %814 = vmatprep.subr.mxu0 0.0
    %815 = vmatpush1.msra.mxu0 0.0
    %816 = vmatprep.subr.mxu0 0.0
    %817 = vmatpush1.msra.mxu0 0.0
    %818 = vmatprep.subr.mxu0 0.0
    %819 = vmatpush1.msra.mxu0 0.0
    %820 = vmatprep.subr.mxu0 0.0
    %821 = vmatpush1.msra.mxu0 0.0
    %822 = vmatprep.subr.mxu0 0.0
    %823 = vmatpush1.msra.mxu0 0.0
    %824 = vmatprep.subr.mxu0 0.0
    %825 = vmatpush1.msra.mxu0 0.0
    %826 = vmatprep.subr.mxu0 0.0
    %827 = vmatpush1.msra.mxu0 0.0
    %828 = vmatprep.subr.mxu0 0.0
    %829 = vmatpush1.msra.mxu0 %v58
    %830 = vmatprep.subr.mxu0 0.0
    %831 = vmatpush1.msra.mxu0 %v57
    %832 = vmatprep.subr.mxu0 0.0
    %833 = vmatpush1.msra.mxu0 %v56
    %834 = vmatprep.subr.mxu0 0.0
    %835 = vmatpush1.msra.mxu0 %v55
    %836 = vmatprep.subr.mxu0 0.0
    %837 = vmatpush2.msra.mxu0 0.0
    %838 = vmatprep.subr.mxu0 0.0
    %839 = vmatpush2.msra.mxu0 0.0
    %840 = vmatprep.subr.mxu0 0.0
    %841 = vmatpush2.msra.mxu0 0.0
    %842 = vmatprep.subr.mxu0 0.0
    %843 = vmatpush2.msra.mxu0 0.0
    %844 = vmatprep.subr.mxu0 0.0
    %845 = vmatpush2.msra.mxu0 0.0
    %846 = vmatprep.subr.mxu0 0.0
    %847 = vmatpush2.msra.mxu0 0.0
    %848 = vmatprep.subr.mxu0 0.0
    %849 = vmatpush2.msra.mxu0 0.0
    %850 = vmatprep.subr.mxu0 0.0
    %851 = vmatpush2.msra.mxu0 0.0
    %852 = vmatprep.subr.mxu0 0.0
    %853 = vmatpush2.msra.mxu0 0.0
    %854 = vmatprep.subr.mxu0 0.0
    %855 = vmatpush2.msra.mxu0 0.0
    %856 = vmatprep.subr.mxu0 0.0
    %857 = vmatpush2.msra.mxu0 0.0
    %858 = vmatprep.subr.mxu0 0.0
    %859 = vmatpush2.msra.mxu0 0.0
    %860 = vmatprep.subr.mxu0 0.0
    %861 = vmatpush2.msra.mxu0 0.0
    %862 = vmatprep.subr.mxu0 0.0
    %863 = vmatpush2.msra.mxu0 0.0
    %864 = vmatprep.subr.mxu0 0.0
    %865 = vmatpush2.msra.mxu0 0.0
    %866 = vmatprep.subr.mxu0 0.0
    %867 = vmatpush2.msra.mxu0 0.0
    %868 = vmatprep.mubr.f32.mxu0 0.0
    %869 = vmatmul.mubr.f32.gmra.mxu0 %v802
    %v870 = vpop.f32.mrf.mxu0
    %v871 = vadd.f32 0.0, %v870
    %v872 = vpop.f32.mrf.mxu0
    %873 = vdwg.mxu0
    %v874 = vadd.f32 %v192, %v871
    %v875 = vxor.u32 %v874, 2147483648
    %v876 = vmul.f32 %v875, 1.442695
    %v877 = vpow.pop %v876
    %v878 = vadd.f32 %v877, 1.0
    %v879 = vrcp.pop %v878
    %v880 = vmul.f32 1.0, %v879
    %v881 = vtanh.pop %v874
    %v882 = vmul.f32 %v880, %v792
    %884 = vrot.lane.b32.xlu0 %v881, 64
    %v885 = vpop.permute.xlu0 %884
    %v887 = vmul.f32 %v880, %v885
    %889 = vrot.lane.b32.xlu0 %v887, 32
    %v890 = vpop.permute.xlu0 %889
    %v892 = vadd.f32 %v882, %v890
    %v893 = vtanh.pop %v892
    %895 = vrot.lane.b32.xlu0 %v893, 64
    %v896 = vpop.permute.xlu0 %895
    %v898 = vmul.f32 %v880, %v896
    %900 = vrot.lane.b32.xlu0 %v898, 32
    %v901 = vpop.permute.xlu0 %900
    %v902 = vsel %vm200, %v901, 0
    %904 = vmatprep.subr.mxu0 0.0
    %905 = vmatpush1.msra.mxu0 0.0
    %906 = vmatprep.subr.mxu0 0.0
    %907 = vmatpush1.msra.mxu0 0.0
    %908 = vmatprep.subr.mxu0 0.0
    %909 = vmatpush1.msra.mxu0 0.0
    %910 = vmatprep.subr.mxu0 0.0
    %911 = vmatpush1.msra.mxu0 0.0
    %912 = vmatprep.subr.mxu0 0.0
    %913 = vmatpush1.msra.mxu0 0.0
    %914 = vmatprep.subr.mxu0 0.0
    %915 = vmatpush1.msra.mxu0 0.0
    %916 = vmatprep.subr.mxu0 0.0
    %917 = vmatpush1.msra.mxu0 0.0
    %918 = vmatprep.subr.mxu0 0.0
    %919 = vmatpush1.msra.mxu0 0.0
    %920 = vmatprep.subr.mxu0 0.0
    %921 = vmatpush1.msra.mxu0 0.0
    %922 = vmatprep.subr.mxu0 0.0
    %923 = vmatpush1.msra.mxu0 0.0
    %924 = vmatprep.subr.mxu0 0.0
    %925 = vmatpush1.msra.mxu0 0.0
    %926 = vmatprep.subr.mxu0 0.0
    %927 = vmatpush1.msra.mxu0 0.0
    %928 = vmatprep.subr.mxu0 0.0
    %929 = vmatpush1.msra.mxu0 %v58
    %930 = vmatprep.subr.mxu0 0.0
    %931 = vmatpush1.msra.mxu0 %v57
    %932 = vmatprep.subr.mxu0 0.0
    %933 = vmatpush1.msra.mxu0 %v56
    %934 = vmatprep.subr.mxu0 0.0
    %935 = vmatpush1.msra.mxu0 %v55
    %936 = vmatprep.subr.mxu0 0.0
    %937 = vmatpush2.msra.mxu0 0.0
    %938 = vmatprep.subr.mxu0 0.0
    %939 = vmatpush2.msra.mxu0 0.0
    %940 = vmatprep.subr.mxu0 0.0
    %941 = vmatpush2.msra.mxu0 0.0
    %942 = vmatprep.subr.mxu0 0.0
    %943 = vmatpush2.msra.mxu0 0.0
    %944 = vmatprep.subr.mxu0 0.0
    %945 = vmatpush2.msra.mxu0 0.0
    %946 = vmatprep.subr.mxu0 0.0
    %947 = vmatpush2.msra.mxu0 0.0
    %948 = vmatprep.subr.mxu0 0.0
    %949 = vmatpush2.msra.mxu0 0.0
    %950 = vmatprep.subr.mxu0 0.0
    %951 = vmatpush2.msra.mxu0 0.0
    %952 = vmatprep.subr.mxu0 0.0
    %953 = vmatpush2.msra.mxu0 0.0
    %954 = vmatprep.subr.mxu0 0.0
    %955 = vmatpush2.msra.mxu0 0.0
    %956 = vmatprep.subr.mxu0 0.0
    %957 = vmatpush2.msra.mxu0 0.0
    %958 = vmatprep.subr.mxu0 0.0
    %959 = vmatpush2.msra.mxu0 0.0
    %960 = vmatprep.subr.mxu0 0.0
    %961 = vmatpush2.msra.mxu0 0.0
    %962 = vmatprep.subr.mxu0 0.0
    %963 = vmatpush2.msra.mxu0 0.0
    %964 = vmatprep.subr.mxu0 0.0
    %965 = vmatpush2.msra.mxu0 0.0
    %966 = vmatprep.subr.mxu0 0.0
    %967 = vmatpush2.msra.mxu0 0.0
    %968 = vmatprep.mubr.f32.mxu0 0.0
    %969 = vmatmul.mubr.f32.gmra.mxu0 %v902
    %v970 = vpop.f32.mrf.mxu0
    %v971 = vadd.f32 0.0, %v970
    %v972 = vpop.f32.mrf.mxu0
    %973 = vdwg.mxu0
    %v974 = vadd.f32 %v197, %v971
    %v975 = vxor.u32 %v974, 2147483648
    %v976 = vmul.f32 %v975, 1.442695
    %v977 = vpow.pop %v976
    %v978 = vadd.f32 %v977, 1.0
    %v979 = vrcp.pop %v978
    %v980 = vmul.f32 1.0, %v979
    %v981 = vtanh.pop %v974
    %v982 = vmul.f32 %v980, %v892
    %984 = vrot.lane.b32.xlu0 %v981, 64
    %v985 = vpop.permute.xlu0 %984
    %v987 = vmul.f32 %v980, %v985
    %989 = vrot.lane.b32.xlu0 %v987, 32
    %v990 = vpop.permute.xlu0 %989
    %v992 = vadd.f32 %v982, %v990
    %v993 = vtanh.pop %v992
    %995 = vrot.lane.b32.xlu0 %v993, 64
    %v996 = vpop.permute.xlu0 %995
    %v998 = vmul.f32 %v980, %v996
    %v999 = vld [vmem:[%s4] sm:$0xff]
    %v1000 = vld [vmem:[%s4 + $0x8] sm:$0xff]
    %v1001 = vld [vmem:[%s4 + $0x10] sm:$0xff]
    %v1002 = vld [vmem:[%s4 + $0x18] sm:$0xff]
    %v1003 = vld [vmem:[%s5] sm:$0xff]
    %v1004 = vld [vmem:[%s5 + $0x8] sm:$0xff]
    %v1005 = vld [vmem:[%s5 + $0x10] sm:$0xff]
    %v1006 = vld [vmem:[%s5 + $0x18] sm:$0xff]
    %v1007 = vld [vmem:[%s6] sm:$0x1]
    %v1009 = vlaneseq
    %v1010 = vshrl.u32 %v1009, 7
    %v1011 = vsub.s32 0, %v1010
    %v1012 = vrot.slane %v1007, %v1011
    %1015 = vrot.lane.b32.xlu0 %v998, 32
    %v1016 = vpop.permute.xlu0 %1015
    %v1017 = vsel %vm200, %v1016, 0
    %1019 = vmatprep.subr.mxu0 0.0
    %1020 = vmatpush1.msra.mxu0 0.0
    %1021 = vmatprep.subr.mxu0 0.0
    %1022 = vmatpush1.msra.mxu0 0.0
    %1023 = vmatprep.subr.mxu0 0.0
    %1024 = vmatpush1.msra.mxu0 0.0
    %1025 = vmatprep.subr.mxu0 0.0
    %1026 = vmatpush1.msra.mxu0 0.0
    %1027 = vmatprep.subr.mxu0 0.0
    %1028 = vmatpush1.msra.mxu0 0.0
    %1029 = vmatprep.subr.mxu0 0.0
    %1030 = vmatpush1.msra.mxu0 0.0
    %1031 = vmatprep.subr.mxu0 0.0
    %1032 = vmatpush1.msra.mxu0 0.0
    %1033 = vmatprep.subr.mxu0 0.0
    %1034 = vmatpush1.msra.mxu0 0.0
    %1035 = vmatprep.subr.mxu0 0.0
    %1036 = vmatpush1.msra.mxu0 0.0
    %1037 = vmatprep.subr.mxu0 0.0
    %1038 = vmatpush1.msra.mxu0 0.0
    %1039 = vmatprep.subr.mxu0 0.0
    %1040 = vmatpush1.msra.mxu0 0.0
    %1041 = vmatprep.subr.mxu0 0.0
    %1042 = vmatpush1.msra.mxu0 0.0
    %1043 = vmatprep.subr.mxu0 0.0
    %1044 = vmatpush1.msra.mxu0 %v1002
    %1045 = vmatprep.subr.mxu0 0.0
    %1046 = vmatpush1.msra.mxu0 %v1001
    %1047 = vmatprep.subr.mxu0 0.0
    %1048 = vmatpush1.msra.mxu0 %v1000
    %1049 = vmatprep.subr.mxu0 0.0
    %1050 = vmatpush1.msra.mxu0 %v999
    %1051 = vmatprep.subr.mxu0 0.0
    %1052 = vmatpush2.msra.mxu0 0.0
    %1053 = vmatprep.subr.mxu0 0.0
    %1054 = vmatpush2.msra.mxu0 0.0
    %1055 = vmatprep.subr.mxu0 0.0
    %1056 = vmatpush2.msra.mxu0 0.0
    %1057 = vmatprep.subr.mxu0 0.0
    %1058 = vmatpush2.msra.mxu0 0.0
    %1059 = vmatprep.subr.mxu0 0.0
    %1060 = vmatpush2.msra.mxu0 0.0
    %1061 = vmatprep.subr.mxu0 0.0
    %1062 = vmatpush2.msra.mxu0 0.0
    %1063 = vmatprep.subr.mxu0 0.0
    %1064 = vmatpush2.msra.mxu0 0.0
    %1065 = vmatprep.subr.mxu0 0.0
    %1066 = vmatpush2.msra.mxu0 0.0
    %1067 = vmatprep.subr.mxu0 0.0
    %1068 = vmatpush2.msra.mxu0 0.0
    %1069 = vmatprep.subr.mxu0 0.0
    %1070 = vmatpush2.msra.mxu0 0.0
    %1071 = vmatprep.subr.mxu0 0.0
    %1072 = vmatpush2.msra.mxu0 0.0
    %1073 = vmatprep.subr.mxu0 0.0
    %1074 = vmatpush2.msra.mxu0 0.0
    %1075 = vmatprep.subr.mxu0 0.0
    %1076 = vmatpush2.msra.mxu0 0.0
    %1077 = vmatprep.subr.mxu0 0.0
    %1078 = vmatpush2.msra.mxu0 0.0
    %1079 = vmatprep.subr.mxu0 0.0
    %1080 = vmatpush2.msra.mxu0 0.0
    %1081 = vmatprep.subr.mxu0 0.0
    %1082 = vmatpush2.msra.mxu0 0.0
    %1083 = vmatprep.mubr.f32.mxu0 0.0
    %1084 = vmatmul.mubr.f32.gmra.mxu0 %v302
    %v1085 = vpop.f32.mrf.mxu0
    %v1086 = vadd.f32 %v1012, %v1085
    %v1087 = vpop.f32.mrf.mxu0
    %1088 = vmatprep.mubr.f32.mxu0 0.0
    %1089 = vmatmul.mubr.f32.gmra.mxu0 %v402
    %v1090 = vpop.f32.mrf.mxu0
    %v1091 = vadd.f32 %v1012, %v1090
    %v1092 = vpop.f32.mrf.mxu0
    %1093 = vmatprep.mubr.f32.mxu0 0.0
    %1094 = vmatmul.mubr.f32.gmra.mxu0 %v502
    %v1095 = vpop.f32.mrf.mxu0
    %v1096 = vadd.f32 %v1012, %v1095
    %v1097 = vpop.f32.mrf.mxu0
    %1098 = vmatprep.mubr.f32.mxu0 0.0
    %1099 = vmatmul.mubr.f32.gmra.mxu0 %v602
    %v1100 = vpop.f32.mrf.mxu0
    %v1101 = vadd.f32 %v1012, %v1100
    %v1102 = vpop.f32.mrf.mxu0
    %1103 = vmatprep.mubr.f32.mxu0 0.0
    %1104 = vmatmul.mubr.f32.gmra.mxu0 %v702
    %v1105 = vpop.f32.mrf.mxu0
    %v1106 = vadd.f32 %v1012, %v1105
    %v1107 = vpop.f32.mrf.mxu0
    %1108 = vmatprep.mubr.f32.mxu0 0.0
    %1109 = vmatmul.mubr.f32.gmra.mxu0 %v802
    %v1110 = vpop.f32.mrf.mxu0
    %v1111 = vadd.f32 %v1012, %v1110
    %v1112 = vpop.f32.mrf.mxu0
    %1113 = vmatprep.mubr.f32.mxu0 0.0
    %1114 = vmatmul.mubr.f32.gmra.mxu0 %v902
    %v1115 = vpop.f32.mrf.mxu0
    %v1116 = vadd.f32 %v1012, %v1115
    %v1117 = vpop.f32.mrf.mxu0
    %1118 = vmatprep.mubr.f32.mxu0 0.0
    %1119 = vmatmul.mubr.f32.gmra.mxu0 %v1017
    %v1120 = vpop.f32.mrf.mxu0
    %v1121 = vadd.f32 %v1012, %v1120
    %v1122 = vpop.f32.mrf.mxu0
    %1123 = vdwg.mxu0
    %1124 = vmatprep.subr.mxu0 0.0
    %1125 = vmatpush1.msra.mxu0 0.0
    %1126 = vmatprep.subr.mxu0 0.0
    %1127 = vmatpush1.msra.mxu0 0.0
    %1128 = vmatprep.subr.mxu0 0.0
    %1129 = vmatpush1.msra.mxu0 0.0
    %1130 = vmatprep.subr.mxu0 0.0
    %1131 = vmatpush1.msra.mxu0 0.0
    %1132 = vmatprep.subr.mxu0 0.0
    %1133 = vmatpush1.msra.mxu0 0.0
    %1134 = vmatprep.subr.mxu0 0.0
    %1135 = vmatpush1.msra.mxu0 0.0
    %1136 = vmatprep.subr.mxu0 0.0
    %1137 = vmatpush1.msra.mxu0 0.0
    %1138 = vmatprep.subr.mxu0 0.0
    %1139 = vmatpush1.msra.mxu0 0.0
    %1140 = vmatprep.subr.mxu0 0.0
    %1141 = vmatpush1.msra.mxu0 0.0
    %1142 = vmatprep.subr.mxu0 0.0
    %1143 = vmatpush1.msra.mxu0 0.0
    %1144 = vmatprep.subr.mxu0 0.0
    %1145 = vmatpush1.msra.mxu0 0.0
    %1146 = vmatprep.subr.mxu0 0.0
    %1147 = vmatpush1.msra.mxu0 0.0
    %1148 = vmatprep.subr.mxu0 0.0
    %1149 = vmatpush1.msra.mxu0 %v1006
    %1150 = vmatprep.subr.mxu0 0.0
    %1151 = vmatpush1.msra.mxu0 %v1005
    %1152 = vmatprep.subr.mxu0 0.0
    %1153 = vmatpush1.msra.mxu0 %v1004
    %1154 = vmatprep.subr.mxu0 0.0
    %1155 = vmatpush1.msra.mxu0 %v1003
    %1156 = vmatprep.subr.mxu0 0.0
    %1157 = vmatpush2.msra.mxu0 0.0
    %1158 = vmatprep.subr.mxu0 0.0
    %1159 = vmatpush2.msra.mxu0 0.0
    %1160 = vmatprep.subr.mxu0 0.0
    %1161 = vmatpush2.msra.mxu0 0.0
    %1162 = vmatprep.subr.mxu0 0.0
    %1163 = vmatpush2.msra.mxu0 0.0
    %1164 = vmatprep.subr.mxu0 0.0
    %1165 = vmatpush2.msra.mxu0 0.0
    %1166 = vmatprep.subr.mxu0 0.0
    %1167 = vmatpush2.msra.mxu0 0.0
    %1168 = vmatprep.subr.mxu0 0.0
    %1169 = vmatpush2.msra.mxu0 0.0
    %1170 = vmatprep.subr.mxu0 0.0
    %1171 = vmatpush2.msra.mxu0 0.0
    %1172 = vmatprep.subr.mxu0 0.0
    %1173 = vmatpush2.msra.mxu0 0.0
    %1174 = vmatprep.subr.mxu0 0.0
    %1175 = vmatpush2.msra.mxu0 0.0
    %1176 = vmatprep.subr.mxu0 0.0
    %1177 = vmatpush2.msra.mxu0 0.0
    %1178 = vmatprep.subr.mxu0 0.0
    %1179 = vmatpush2.msra.mxu0 0.0
    %1180 = vmatprep.subr.mxu0 0.0
    %1181 = vmatpush2.msra.mxu0 0.0
    %1182 = vmatprep.subr.mxu0 0.0
    %1183 = vmatpush2.msra.mxu0 0.0
    %1184 = vmatprep.subr.mxu0 0.0
    %1185 = vmatpush2.msra.mxu0 0.0
    %1186 = vmatprep.subr.mxu0 0.0
    %1187 = vmatpush2.msra.mxu0 0.0
    %1188 = vmatprep.mubr.f32.mxu0 0.0
    %1189 = vmatmul.mubr.f32.gmra.mxu0 %v202
    %v1190 = vpop.f32.mrf.mxu0
    %v1191 = vadd.f32 0.0, %v1190
    %v1192 = vpop.f32.mrf.mxu0
    %1193 = vdwg.mxu0
    %v1194 = vadd.f32 %v1086, %v1191
    %v1195 = vxor.u32 %v1194, 2147483648
    %v1196 = vmul.f32 %v1195, 1.442695
    %v1197 = vpow.pop %v1196
    %v1198 = vadd.f32 %v1197, 1.0
    %v1199 = vrcp.pop %v1198
    %v1200 = vmul.f32 1.0, %v1199
    %v1201 = vtanh.pop %v1194
    %v1202 = vmul.f32 %v1200, 0.0
    %1204 = vrot.lane.b32.xlu0 %v1201, 64
    %v1205 = vpop.permute.xlu0 %1204
    %v1207 = vmul.f32 %v1200, %v1205
    %1209 = vrot.lane.b32.xlu0 %v1207, 32
    %v1210 = vpop.permute.xlu0 %1209
    %v1212 = vadd.f32 %v1202, %v1210
    %v1213 = vtanh.pop %v1212
    %1215 = vrot.lane.b32.xlu0 %v1213, 64
    %v1216 = vpop.permute.xlu0 %1215
    %v1218 = vmul.f32 %v1200, %v1216
    %1220 = vrot.lane.b32.xlu0 %v1218, 32
    %v1221 = vpop.permute.xlu0 %1220
    %v1222 = vsel %vm200, %v1221, 0
    %1224 = vmatprep.subr.mxu0 0.0
    %1225 = vmatpush1.msra.mxu0 0.0
    %1226 = vmatprep.subr.mxu0 0.0
    %1227 = vmatpush1.msra.mxu0 0.0
    %1228 = vmatprep.subr.mxu0 0.0
    %1229 = vmatpush1.msra.mxu0 0.0
    %1230 = vmatprep.subr.mxu0 0.0
    %1231 = vmatpush1.msra.mxu0 0.0
    %1232 = vmatprep.subr.mxu0 0.0
    %1233 = vmatpush1.msra.mxu0 0.0
    %1234 = vmatprep.subr.mxu0 0.0
    %1235 = vmatpush1.msra.mxu0 0.0
    %1236 = vmatprep.subr.mxu0 0.0
    %1237 = vmatpush1.msra.mxu0 0.0
    %1238 = vmatprep.subr.mxu0 0.0
    %1239 = vmatpush1.msra.mxu0 0.0
    %1240 = vmatprep.subr.mxu0 0.0
    %1241 = vmatpush1.msra.mxu0 0.0
    %1242 = vmatprep.subr.mxu0 0.0
    %1243 = vmatpush1.msra.mxu0 0.0
    %1244 = vmatprep.subr.mxu0 0.0
    %1245 = vmatpush1.msra.mxu0 0.0
    %1246 = vmatprep.subr.mxu0 0.0
    %1247 = vmatpush1.msra.mxu0 0.0
    %1248 = vmatprep.subr.mxu0 0.0
    %1249 = vmatpush1.msra.mxu0 %v1006
    %1250 = vmatprep.subr.mxu0 0.0
    %1251 = vmatpush1.msra.mxu0 %v1005
    %1252 = vmatprep.subr.mxu0 0.0
    %1253 = vmatpush1.msra.mxu0 %v1004
    %1254 = vmatprep.subr.mxu0 0.0
    %1255 = vmatpush1.msra.mxu0 %v1003
    %1256 = vmatprep.subr.mxu0 0.0
    %1257 = vmatpush2.msra.mxu0 0.0
    %1258 = vmatprep.subr.mxu0 0.0
    %1259 = vmatpush2.msra.mxu0 0.0
    %1260 = vmatprep.subr.mxu0 0.0
    %1261 = vmatpush2.msra.mxu0 0.0
    %1262 = vmatprep.subr.mxu0 0.0
    %1263 = vmatpush2.msra.mxu0 0.0
    %1264 = vmatprep.subr.mxu0 0.0
    %1265 = vmatpush2.msra.mxu0 0.0
    %1266 = vmatprep.subr.mxu0 0.0
    %1267 = vmatpush2.msra.mxu0 0.0
    %1268 = vmatprep.subr.mxu0 0.0
    %1269 = vmatpush2.msra.mxu0 0.0
    %1270 = vmatprep.subr.mxu0 0.0
    %1271 = vmatpush2.msra.mxu0 0.0
    %1272 = vmatprep.subr.mxu0 0.0
    %1273 = vmatpush2.msra.mxu0 0.0
    %1274 = vmatprep.subr.mxu0 0.0
    %1275 = vmatpush2.msra.mxu0 0.0
    %1276 = vmatprep.subr.mxu0 0.0
    %1277 = vmatpush2.msra.mxu0 0.0
    %1278 = vmatprep.subr.mxu0 0.0
    %1279 = vmatpush2.msra.mxu0 0.0
    %1280 = vmatprep.subr.mxu0 0.0
    %1281 = vmatpush2.msra.mxu0 0.0
    %1282 = vmatprep.subr.mxu0 0.0
    %1283 = vmatpush2.msra.mxu0 0.0
    %1284 = vmatprep.subr.mxu0 0.0
    %1285 = vmatpush2.msra.mxu0 0.0
    %1286 = vmatprep.subr.mxu0 0.0
    %1287 = vmatpush2.msra.mxu0 0.0
    %1288 = vmatprep.mubr.f32.mxu0 0.0
    %1289 = vmatmul.mubr.f32.gmra.mxu0 %v1222
    %v1290 = vpop.f32.mrf.mxu0
    %v1291 = vadd.f32 0.0, %v1290
    %v1292 = vpop.f32.mrf.mxu0
    %1293 = vdwg.mxu0
    %v1294 = vadd.f32 %v1091, %v1291
    %v1295 = vxor.u32 %v1294, 2147483648
    %v1296 = vmul.f32 %v1295, 1.442695
    %v1297 = vpow.pop %v1296
    %v1298 = vadd.f32 %v1297, 1.0
    %v1299 = vrcp.pop %v1298
    %v1300 = vmul.f32 1.0, %v1299
    %v1301 = vtanh.pop %v1294
    %v1302 = vmul.f32 %v1300, %v1212
    %1304 = vrot.lane.b32.xlu0 %v1301, 64
    %v1305 = vpop.permute.xlu0 %1304
    %v1307 = vmul.f32 %v1300, %v1305
    %1309 = vrot.lane.b32.xlu0 %v1307, 32
    %v1310 = vpop.permute.xlu0 %1309
    %v1312 = vadd.f32 %v1302, %v1310
    %v1313 = vtanh.pop %v1312
    %1315 = vrot.lane.b32.xlu0 %v1313, 64
    %v1316 = vpop.permute.xlu0 %1315
    %v1318 = vmul.f32 %v1300, %v1316
    %1320 = vrot.lane.b32.xlu0 %v1318, 32
    %v1321 = vpop.permute.xlu0 %1320
    %v1322 = vsel %vm200, %v1321, 0
    %1324 = vmatprep.subr.mxu0 0.0
    %1325 = vmatpush1.msra.mxu0 0.0
    %1326 = vmatprep.subr.mxu0 0.0
    %1327 = vmatpush1.msra.mxu0 0.0
    %1328 = vmatprep.subr.mxu0 0.0
    %1329 = vmatpush1.msra.mxu0 0.0
    %1330 = vmatprep.subr.mxu0 0.0
    %1331 = vmatpush1.msra.mxu0 0.0
    %1332 = vmatprep.subr.mxu0 0.0
    %1333 = vmatpush1.msra.mxu0 0.0
    %1334 = vmatprep.subr.mxu0 0.0
    %1335 = vmatpush1.msra.mxu0 0.0
    %1336 = vmatprep.subr.mxu0 0.0
    %1337 = vmatpush1.msra.mxu0 0.0
    %1338 = vmatprep.subr.mxu0 0.0
    %1339 = vmatpush1.msra.mxu0 0.0
    %1340 = vmatprep.subr.mxu0 0.0
    %1341 = vmatpush1.msra.mxu0 0.0
    %1342 = vmatprep.subr.mxu0 0.0
    %1343 = vmatpush1.msra.mxu0 0.0
    %1344 = vmatprep.subr.mxu0 0.0
    %1345 = vmatpush1.msra.mxu0 0.0
    %1346 = vmatprep.subr.mxu0 0.0
    %1347 = vmatpush1.msra.mxu0 0.0
    %1348 = vmatprep.subr.mxu0 0.0
    %1349 = vmatpush1.msra.mxu0 %v1006
    %1350 = vmatprep.subr.mxu0 0.0
    %1351 = vmatpush1.msra.mxu0 %v1005
    %1352 = vmatprep.subr.mxu0 0.0
    %1353 = vmatpush1.msra.mxu0 %v1004
    %1354 = vmatprep.subr.mxu0 0.0
    %1355 = vmatpush1.msra.mxu0 %v1003
    %1356 = vmatprep.subr.mxu0 0.0
    %1357 = vmatpush2.msra.mxu0 0.0
    %1358 = vmatprep.subr.mxu0 0.0
    %1359 = vmatpush2.msra.mxu0 0.0
    %1360 = vmatprep.subr.mxu0 0.0
    %1361 = vmatpush2.msra.mxu0 0.0
    %1362 = vmatprep.subr.mxu0 0.0
    %1363 = vmatpush2.msra.mxu0 0.0
    %1364 = vmatprep.subr.mxu0 0.0
    %1365 = vmatpush2.msra.mxu0 0.0
    %1366 = vmatprep.subr.mxu0 0.0
    %1367 = vmatpush2.msra.mxu0 0.0
    %1368 = vmatprep.subr.mxu0 0.0
    %1369 = vmatpush2.msra.mxu0 0.0
    %1370 = vmatprep.subr.mxu0 0.0
    %1371 = vmatpush2.msra.mxu0 0.0
    %1372 = vmatprep.subr.mxu0 0.0
    %1373 = vmatpush2.msra.mxu0 0.0
    %1374 = vmatprep.subr.mxu0 0.0
    %1375 = vmatpush2.msra.mxu0 0.0
    %1376 = vmatprep.subr.mxu0 0.0
    %1377 = vmatpush2.msra.mxu0 0.0
    %1378 = vmatprep.subr.mxu0 0.0
    %1379 = vmatpush2.msra.mxu0 0.0
    %1380 = vmatprep.subr.mxu0 0.0
    %1381 = vmatpush2.msra.mxu0 0.0
    %1382 = vmatprep.subr.mxu0 0.0
    %1383 = vmatpush2.msra.mxu0 0.0
    %1384 = vmatprep.subr.mxu0 0.0
    %1385 = vmatpush2.msra.mxu0 0.0
    %1386 = vmatprep.subr.mxu0 0.0
    %1387 = vmatpush2.msra.mxu0 0.0
    %1388 = vmatprep.mubr.f32.mxu0 0.0
    %1389 = vmatmul.mubr.f32.gmra.mxu0 %v1322
    %v1390 = vpop.f32.mrf.mxu0
    %v1391 = vadd.f32 0.0, %v1390
    %v1392 = vpop.f32.mrf.mxu0
    %1393 = vdwg.mxu0
    %v1394 = vadd.f32 %v1096, %v1391
    %v1395 = vxor.u32 %v1394, 2147483648
    %v1396 = vmul.f32 %v1395, 1.442695
    %v1397 = vpow.pop %v1396
    %v1398 = vadd.f32 %v1397, 1.0
    %v1399 = vrcp.pop %v1398
    %v1400 = vmul.f32 1.0, %v1399
    %v1401 = vtanh.pop %v1394
    %v1402 = vmul.f32 %v1400, %v1312
    %1404 = vrot.lane.b32.xlu0 %v1401, 64
    %v1405 = vpop.permute.xlu0 %1404
    %v1407 = vmul.f32 %v1400, %v1405
    %1409 = vrot.lane.b32.xlu0 %v1407, 32
    %v1410 = vpop.permute.xlu0 %1409
    %v1412 = vadd.f32 %v1402, %v1410
    %v1413 = vtanh.pop %v1412
    %1415 = vrot.lane.b32.xlu0 %v1413, 64
    %v1416 = vpop.permute.xlu0 %1415
    %v1418 = vmul.f32 %v1400, %v1416
    %1420 = vrot.lane.b32.xlu0 %v1418, 32
    %v1421 = vpop.permute.xlu0 %1420
    %v1422 = vsel %vm200, %v1421, 0
    %1424 = vmatprep.subr.mxu0 0.0
    %1425 = vmatpush1.msra.mxu0 0.0
    %1426 = vmatprep.subr.mxu0 0.0
    %1427 = vmatpush1.msra.mxu0 0.0
    %1428 = vmatprep.subr.mxu0 0.0
    %1429 = vmatpush1.msra.mxu0 0.0
    %1430 = vmatprep.subr.mxu0 0.0
    %1431 = vmatpush1.msra.mxu0 0.0
    %1432 = vmatprep.subr.mxu0 0.0
    %1433 = vmatpush1.msra.mxu0 0.0
    %1434 = vmatprep.subr.mxu0 0.0
    %1435 = vmatpush1.msra.mxu0 0.0
    %1436 = vmatprep.subr.mxu0 0.0
    %1437 = vmatpush1.msra.mxu0 0.0
    %1438 = vmatprep.subr.mxu0 0.0
    %1439 = vmatpush1.msra.mxu0 0.0
    %1440 = vmatprep.subr.mxu0 0.0
    %1441 = vmatpush1.msra.mxu0 0.0
    %1442 = vmatprep.subr.mxu0 0.0
    %1443 = vmatpush1.msra.mxu0 0.0
    %1444 = vmatprep.subr.mxu0 0.0
    %1445 = vmatpush1.msra.mxu0 0.0
    %1446 = vmatprep.subr.mxu0 0.0
    %1447 = vmatpush1.msra.mxu0 0.0
    %1448 = vmatprep.subr.mxu0 0.0
    %1449 = vmatpush1.msra.mxu0 %v1006
    %1450 = vmatprep.subr.mxu0 0.0
    %1451 = vmatpush1.msra.mxu0 %v1005
    %1452 = vmatprep.subr.mxu0 0.0
    %1453 = vmatpush1.msra.mxu0 %v1004
    %1454 = vmatprep.subr.mxu0 0.0
    %1455 = vmatpush1.msra.mxu0 %v1003
    %1456 = vmatprep.subr.mxu0 0.0
    %1457 = vmatpush2.msra.mxu0 0.0
    %1458 = vmatprep.subr.mxu0 0.0
    %1459 = vmatpush2.msra.mxu0 0.0
    %1460 = vmatprep.subr.mxu0 0.0
    %1461 = vmatpush2.msra.mxu0 0.0
    %1462 = vmatprep.subr.mxu0 0.0
    %1463 = vmatpush2.msra.mxu0 0.0
    %1464 = vmatprep.subr.mxu0 0.0
    %1465 = vmatpush2.msra.mxu0 0.0
    %1466 = vmatprep.subr.mxu0 0.0
    %1467 = vmatpush2.msra.mxu0 0.0
    %1468 = vmatprep.subr.mxu0 0.0
    %1469 = vmatpush2.msra.mxu0 0.0
    %1470 = vmatprep.subr.mxu0 0.0
    %1471 = vmatpush2.msra.mxu0 0.0
    %1472 = vmatprep.subr.mxu0 0.0
    %1473 = vmatpush2.msra.mxu0 0.0
    %1474 = vmatprep.subr.mxu0 0.0
    %1475 = vmatpush2.msra.mxu0 0.0
    %1476 = vmatprep.subr.mxu0 0.0
    %1477 = vmatpush2.msra.mxu0 0.0
    %1478 = vmatprep.subr.mxu0 0.0
    %1479 = vmatpush2.msra.mxu0 0.0
    %1480 = vmatprep.subr.mxu0 0.0
    %1481 = vmatpush2.msra.mxu0 0.0
    %1482 = vmatprep.subr.mxu0 0.0
    %1483 = vmatpush2.msra.mxu0 0.0
    %1484 = vmatprep.subr.mxu0 0.0
    %1485 = vmatpush2.msra.mxu0 0.0
    %1486 = vmatprep.subr.mxu0 0.0
    %1487 = vmatpush2.msra.mxu0 0.0
    %1488 = vmatprep.mubr.f32.mxu0 0.0
    %1489 = vmatmul.mubr.f32.gmra.mxu0 %v1422
    %v1490 = vpop.f32.mrf.mxu0
    %v1491 = vadd.f32 0.0, %v1490
    %v1492 = vpop.f32.mrf.mxu0
    %1493 = vdwg.mxu0
    %v1494 = vadd.f32 %v1101, %v1491
    %v1495 = vxor.u32 %v1494, 2147483648
    %v1496 = vmul.f32 %v1495, 1.442695
    %v1497 = vpow.pop %v1496
    %v1498 = vadd.f32 %v1497, 1.0
    %v1499 = vrcp.pop %v1498
    %v1500 = vmul.f32 1.0, %v1499
    %v1501 = vtanh.pop %v1494
    %v1502 = vmul.f32 %v1500, %v1412
    %1504 = vrot.lane.b32.xlu0 %v1501, 64
    %v1505 = vpop.permute.xlu0 %1504
    %v1507 = vmul.f32 %v1500, %v1505
    %1509 = vrot.lane.b32.xlu0 %v1507, 32
    %v1510 = vpop.permute.xlu0 %1509
    %v1512 = vadd.f32 %v1502, %v1510
    %v1513 = vtanh.pop %v1512
    %1515 = vrot.lane.b32.xlu0 %v1513, 64
    %v1516 = vpop.permute.xlu0 %1515
    %v1518 = vmul.f32 %v1500, %v1516
    %1520 = vrot.lane.b32.xlu0 %v1518, 32
    %v1521 = vpop.permute.xlu0 %1520
    %v1522 = vsel %vm200, %v1521, 0
    %1524 = vmatprep.subr.mxu0 0.0
    %1525 = vmatpush1.msra.mxu0 0.0
    %1526 = vmatprep.subr.mxu0 0.0
    %1527 = vmatpush1.msra.mxu0 0.0
    %1528 = vmatprep.subr.mxu0 0.0
    %1529 = vmatpush1.msra.mxu0 0.0
    %1530 = vmatprep.subr.mxu0 0.0
    %1531 = vmatpush1.msra.mxu0 0.0
    %1532 = vmatprep.subr.mxu0 0.0
    %1533 = vmatpush1.msra.mxu0 0.0
    %1534 = vmatprep.subr.mxu0 0.0
    %1535 = vmatpush1.msra.mxu0 0.0
    %1536 = vmatprep.subr.mxu0 0.0
    %1537 = vmatpush1.msra.mxu0 0.0
    %1538 = vmatprep.subr.mxu0 0.0
    %1539 = vmatpush1.msra.mxu0 0.0
    %1540 = vmatprep.subr.mxu0 0.0
    %1541 = vmatpush1.msra.mxu0 0.0
    %1542 = vmatprep.subr.mxu0 0.0
    %1543 = vmatpush1.msra.mxu0 0.0
    %1544 = vmatprep.subr.mxu0 0.0
    %1545 = vmatpush1.msra.mxu0 0.0
    %1546 = vmatprep.subr.mxu0 0.0
    %1547 = vmatpush1.msra.mxu0 0.0
    %1548 = vmatprep.subr.mxu0 0.0
    %1549 = vmatpush1.msra.mxu0 %v1006
    %1550 = vmatprep.subr.mxu0 0.0
    %1551 = vmatpush1.msra.mxu0 %v1005
    %1552 = vmatprep.subr.mxu0 0.0
    %1553 = vmatpush1.msra.mxu0 %v1004
    %1554 = vmatprep.subr.mxu0 0.0
    %1555 = vmatpush1.msra.mxu0 %v1003
    %1556 = vmatprep.subr.mxu0 0.0
    %1557 = vmatpush2.msra.mxu0 0.0
    %1558 = vmatprep.subr.mxu0 0.0
    %1559 = vmatpush2.msra.mxu0 0.0
    %1560 = vmatprep.subr.mxu0 0.0
    %1561 = vmatpush2.msra.mxu0 0.0
    %1562 = vmatprep.subr.mxu0 0.0
    %1563 = vmatpush2.msra.mxu0 0.0
    %1564 = vmatprep.subr.mxu0 0.0
    %1565 = vmatpush2.msra.mxu0 0.0
    %1566 = vmatprep.subr.mxu0 0.0
    %1567 = vmatpush2.msra.mxu0 0.0
    %1568 = vmatprep.subr.mxu0 0.0
    %1569 = vmatpush2.msra.mxu0 0.0
    %1570 = vmatprep.subr.mxu0 0.0
    %1571 = vmatpush2.msra.mxu0 0.0
    %1572 = vmatprep.subr.mxu0 0.0
    %1573 = vmatpush2.msra.mxu0 0.0
    %1574 = vmatprep.subr.mxu0 0.0
    %1575 = vmatpush2.msra.mxu0 0.0
    %1576 = vmatprep.subr.mxu0 0.0
    %1577 = vmatpush2.msra.mxu0 0.0
    %1578 = vmatprep.subr.mxu0 0.0
    %1579 = vmatpush2.msra.mxu0 0.0
    %1580 = vmatprep.subr.mxu0 0.0
    %1581 = vmatpush2.msra.mxu0 0.0
    %1582 = vmatprep.subr.mxu0 0.0
    %1583 = vmatpush2.msra.mxu0 0.0
    %1584 = vmatprep.subr.mxu0 0.0
    %1585 = vmatpush2.msra.mxu0 0.0
    %1586 = vmatprep.subr.mxu0 0.0
    %1587 = vmatpush2.msra.mxu0 0.0
    %1588 = vmatprep.mubr.f32.mxu0 0.0
    %1589 = vmatmul.mubr.f32.gmra.mxu0 %v1522
    %v1590 = vpop.f32.mrf.mxu0
    %v1591 = vadd.f32 0.0, %v1590
    %v1592 = vpop.f32.mrf.mxu0
    %1593 = vdwg.mxu0
    %v1594 = vadd.f32 %v1106, %v1591
    %v1595 = vxor.u32 %v1594, 2147483648
    %v1596 = vmul.f32 %v1595, 1.442695
    %v1597 = vpow.pop %v1596
    %v1598 = vadd.f32 %v1597, 1.0
    %v1599 = vrcp.pop %v1598
    %v1600 = vmul.f32 1.0, %v1599
    %v1601 = vtanh.pop %v1594
    %v1602 = vmul.f32 %v1600, %v1512
    %1604 = vrot.lane.b32.xlu0 %v1601, 64
    %v1605 = vpop.permute.xlu0 %1604
    %v1607 = vmul.f32 %v1600, %v1605
    %1609 = vrot.lane.b32.xlu0 %v1607, 32
    %v1610 = vpop.permute.xlu0 %1609
    %v1612 = vadd.f32 %v1602, %v1610
    %v1613 = vtanh.pop %v1612
    %1615 = vrot.lane.b32.xlu0 %v1613, 64
    %v1616 = vpop.permute.xlu0 %1615
    %v1618 = vmul.f32 %v1600, %v1616
    %1620 = vrot.lane.b32.xlu0 %v1618, 32
    %v1621 = vpop.permute.xlu0 %1620
    %v1622 = vsel %vm200, %v1621, 0
    %1624 = vmatprep.subr.mxu0 0.0
    %1625 = vmatpush1.msra.mxu0 0.0
    %1626 = vmatprep.subr.mxu0 0.0
    %1627 = vmatpush1.msra.mxu0 0.0
    %1628 = vmatprep.subr.mxu0 0.0
    %1629 = vmatpush1.msra.mxu0 0.0
    %1630 = vmatprep.subr.mxu0 0.0
    %1631 = vmatpush1.msra.mxu0 0.0
    %1632 = vmatprep.subr.mxu0 0.0
    %1633 = vmatpush1.msra.mxu0 0.0
    %1634 = vmatprep.subr.mxu0 0.0
    %1635 = vmatpush1.msra.mxu0 0.0
    %1636 = vmatprep.subr.mxu0 0.0
    %1637 = vmatpush1.msra.mxu0 0.0
    %1638 = vmatprep.subr.mxu0 0.0
    %1639 = vmatpush1.msra.mxu0 0.0
    %1640 = vmatprep.subr.mxu0 0.0
    %1641 = vmatpush1.msra.mxu0 0.0
    %1642 = vmatprep.subr.mxu0 0.0
    %1643 = vmatpush1.msra.mxu0 0.0
    %1644 = vmatprep.subr.mxu0 0.0
    %1645 = vmatpush1.msra.mxu0 0.0
    %1646 = vmatprep.subr.mxu0 0.0
    %1647 = vmatpush1.msra.mxu0 0.0
    %1648 = vmatprep.subr.mxu0 0.0
    %1649 = vmatpush1.msra.mxu0 %v1006
    %1650 = vmatprep.subr.mxu0 0.0
    %1651 = vmatpush1.msra.mxu0 %v1005
    %1652 = vmatprep.subr.mxu0 0.0
    %1653 = vmatpush1.msra.mxu0 %v1004
    %1654 = vmatprep.subr.mxu0 0.0
    %1655 = vmatpush1.msra.mxu0 %v1003
    %1656 = vmatprep.subr.mxu0 0.0
    %1657 = vmatpush2.msra.mxu0 0.0
    %1658 = vmatprep.subr.mxu0 0.0
    %1659 = vmatpush2.msra.mxu0 0.0
    %1660 = vmatprep.subr.mxu0 0.0
    %1661 = vmatpush2.msra.mxu0 0.0
    %1662 = vmatprep.subr.mxu0 0.0
    %1663 = vmatpush2.msra.mxu0 0.0
    %1664 = vmatprep.subr.mxu0 0.0
    %1665 = vmatpush2.msra.mxu0 0.0
    %1666 = vmatprep.subr.mxu0 0.0
    %1667 = vmatpush2.msra.mxu0 0.0
    %1668 = vmatprep.subr.mxu0 0.0
    %1669 = vmatpush2.msra.mxu0 0.0
    %1670 = vmatprep.subr.mxu0 0.0
    %1671 = vmatpush2.msra.mxu0 0.0
    %1672 = vmatprep.subr.mxu0 0.0
    %1673 = vmatpush2.msra.mxu0 0.0
    %1674 = vmatprep.subr.mxu0 0.0
    %1675 = vmatpush2.msra.mxu0 0.0
    %1676 = vmatprep.subr.mxu0 0.0
    %1677 = vmatpush2.msra.mxu0 0.0
    %1678 = vmatprep.subr.mxu0 0.0
    %1679 = vmatpush2.msra.mxu0 0.0
    %1680 = vmatprep.subr.mxu0 0.0
    %1681 = vmatpush2.msra.mxu0 0.0
    %1682 = vmatprep.subr.mxu0 0.0
    %1683 = vmatpush2.msra.mxu0 0.0
    %1684 = vmatprep.subr.mxu0 0.0
    %1685 = vmatpush2.msra.mxu0 0.0
    %1686 = vmatprep.subr.mxu0 0.0
    %1687 = vmatpush2.msra.mxu0 0.0
    %1688 = vmatprep.mubr.f32.mxu0 0.0
    %1689 = vmatmul.mubr.f32.gmra.mxu0 %v1622
    %v1690 = vpop.f32.mrf.mxu0
    %v1691 = vadd.f32 0.0, %v1690
    %v1692 = vpop.f32.mrf.mxu0
    %1693 = vdwg.mxu0
    %v1694 = vadd.f32 %v1111, %v1691
    %v1695 = vxor.u32 %v1694, 2147483648
    %v1696 = vmul.f32 %v1695, 1.442695
    %v1697 = vpow.pop %v1696
    %v1698 = vadd.f32 %v1697, 1.0
    %v1699 = vrcp.pop %v1698
    %v1700 = vmul.f32 1.0, %v1699
    %v1701 = vtanh.pop %v1694
    %v1702 = vmul.f32 %v1700, %v1612
    %1704 = vrot.lane.b32.xlu0 %v1701, 64
    %v1705 = vpop.permute.xlu0 %1704
    %v1707 = vmul.f32 %v1700, %v1705
    %1709 = vrot.lane.b32.xlu0 %v1707, 32
    %v1710 = vpop.permute.xlu0 %1709
    %v1712 = vadd.f32 %v1702, %v1710
    %v1713 = vtanh.pop %v1712
    %1715 = vrot.lane.b32.xlu0 %v1713, 64
    %v1716 = vpop.permute.xlu0 %1715
    %v1718 = vmul.f32 %v1700, %v1716
    %1720 = vrot.lane.b32.xlu0 %v1718, 32
    %v1721 = vpop.permute.xlu0 %1720
    %v1722 = vsel %vm200, %v1721, 0
    %1724 = vmatprep.subr.mxu0 0.0
    %1725 = vmatpush1.msra.mxu0 0.0
    %1726 = vmatprep.subr.mxu0 0.0
    %1727 = vmatpush1.msra.mxu0 0.0
    %1728 = vmatprep.subr.mxu0 0.0
    %1729 = vmatpush1.msra.mxu0 0.0
    %1730 = vmatprep.subr.mxu0 0.0
    %1731 = vmatpush1.msra.mxu0 0.0
    %1732 = vmatprep.subr.mxu0 0.0
    %1733 = vmatpush1.msra.mxu0 0.0
    %1734 = vmatprep.subr.mxu0 0.0
    %1735 = vmatpush1.msra.mxu0 0.0
    %1736 = vmatprep.subr.mxu0 0.0
    %1737 = vmatpush1.msra.mxu0 0.0
    %1738 = vmatprep.subr.mxu0 0.0
    %1739 = vmatpush1.msra.mxu0 0.0
    %1740 = vmatprep.subr.mxu0 0.0
    %1741 = vmatpush1.msra.mxu0 0.0
    %1742 = vmatprep.subr.mxu0 0.0
    %1743 = vmatpush1.msra.mxu0 0.0
    %1744 = vmatprep.subr.mxu0 0.0
    %1745 = vmatpush1.msra.mxu0 0.0
    %1746 = vmatprep.subr.mxu0 0.0
    %1747 = vmatpush1.msra.mxu0 0.0
    %1748 = vmatprep.subr.mxu0 0.0
    %1749 = vmatpush1.msra.mxu0 %v1006
    %1750 = vmatprep.subr.mxu0 0.0
    %1751 = vmatpush1.msra.mxu0 %v1005
    %1752 = vmatprep.subr.mxu0 0.0
    %1753 = vmatpush1.msra.mxu0 %v1004
    %1754 = vmatprep.subr.mxu0 0.0
    %1755 = vmatpush1.msra.mxu0 %v1003
    %1756 = vmatprep.subr.mxu0 0.0
    %1757 = vmatpush2.msra.mxu0 0.0
    %1758 = vmatprep.subr.mxu0 0.0
    %1759 = vmatpush2.msra.mxu0 0.0
    %1760 = vmatprep.subr.mxu0 0.0
    %1761 = vmatpush2.msra.mxu0 0.0
    %1762 = vmatprep.subr.mxu0 0.0
    %1763 = vmatpush2.msra.mxu0 0.0
    %1764 = vmatprep.subr.mxu0 0.0
    %1765 = vmatpush2.msra.mxu0 0.0
    %1766 = vmatprep.subr.mxu0 0.0
    %1767 = vmatpush2.msra.mxu0 0.0
    %1768 = vmatprep.subr.mxu0 0.0
    %1769 = vmatpush2.msra.mxu0 0.0
    %1770 = vmatprep.subr.mxu0 0.0
    %1771 = vmatpush2.msra.mxu0 0.0
    %1772 = vmatprep.subr.mxu0 0.0
    %1773 = vmatpush2.msra.mxu0 0.0
    %1774 = vmatprep.subr.mxu0 0.0
    %1775 = vmatpush2.msra.mxu0 0.0
    %1776 = vmatprep.subr.mxu0 0.0
    %1777 = vmatpush2.msra.mxu0 0.0
    %1778 = vmatprep.subr.mxu0 0.0
    %1779 = vmatpush2.msra.mxu0 0.0
    %1780 = vmatprep.subr.mxu0 0.0
    %1781 = vmatpush2.msra.mxu0 0.0
    %1782 = vmatprep.subr.mxu0 0.0
    %1783 = vmatpush2.msra.mxu0 0.0
    %1784 = vmatprep.subr.mxu0 0.0
    %1785 = vmatpush2.msra.mxu0 0.0
    %1786 = vmatprep.subr.mxu0 0.0
    %1787 = vmatpush2.msra.mxu0 0.0
    %1788 = vmatprep.mubr.f32.mxu0 0.0
    %1789 = vmatmul.mubr.f32.gmra.mxu0 %v1722
    %v1790 = vpop.f32.mrf.mxu0
    %v1791 = vadd.f32 0.0, %v1790
    %v1792 = vpop.f32.mrf.mxu0
    %1793 = vdwg.mxu0
    %v1794 = vadd.f32 %v1116, %v1791
    %v1795 = vxor.u32 %v1794, 2147483648
    %v1796 = vmul.f32 %v1795, 1.442695
    %v1797 = vpow.pop %v1796
    %v1798 = vadd.f32 %v1797, 1.0
    %v1799 = vrcp.pop %v1798
    %v1800 = vmul.f32 1.0, %v1799
    %v1801 = vtanh.pop %v1794
    %v1802 = vmul.f32 %v1800, %v1712
    %1804 = vrot.lane.b32.xlu0 %v1801, 64
    %v1805 = vpop.permute.xlu0 %1804
    %v1807 = vmul.f32 %v1800, %v1805
    %1809 = vrot.lane.b32.xlu0 %v1807, 32
    %v1810 = vpop.permute.xlu0 %1809
    %v1812 = vadd.f32 %v1802, %v1810
    %v1813 = vtanh.pop %v1812
    %1815 = vrot.lane.b32.xlu0 %v1813, 64
    %v1816 = vpop.permute.xlu0 %1815
    %v1818 = vmul.f32 %v1800, %v1816
    %1820 = vrot.lane.b32.xlu0 %v1818, 32
    %v1821 = vpop.permute.xlu0 %1820
    %v1822 = vsel %vm200, %v1821, 0
    %1824 = vmatprep.subr.mxu0 0.0
    %1825 = vmatpush1.msra.mxu0 0.0
    %1826 = vmatprep.subr.mxu0 0.0
    %1827 = vmatpush1.msra.mxu0 0.0
    %1828 = vmatprep.subr.mxu0 0.0
    %1829 = vmatpush1.msra.mxu0 0.0
    %1830 = vmatprep.subr.mxu0 0.0
    %1831 = vmatpush1.msra.mxu0 0.0
    %1832 = vmatprep.subr.mxu0 0.0
    %1833 = vmatpush1.msra.mxu0 0.0
    %1834 = vmatprep.subr.mxu0 0.0
    %1835 = vmatpush1.msra.mxu0 0.0
    %1836 = vmatprep.subr.mxu0 0.0
    %1837 = vmatpush1.msra.mxu0 0.0
    %1838 = vmatprep.subr.mxu0 0.0
    %1839 = vmatpush1.msra.mxu0 0.0
    %1840 = vmatprep.subr.mxu0 0.0
    %1841 = vmatpush1.msra.mxu0 0.0
    %1842 = vmatprep.subr.mxu0 0.0
    %1843 = vmatpush1.msra.mxu0 0.0
    %1844 = vmatprep.subr.mxu0 0.0
    %1845 = vmatpush1.msra.mxu0 0.0
    %1846 = vmatprep.subr.mxu0 0.0
    %1847 = vmatpush1.msra.mxu0 0.0
    %1848 = vmatprep.subr.mxu0 0.0
    %1849 = vmatpush1.msra.mxu0 %v1006
    %1850 = vmatprep.subr.mxu0 0.0
    %1851 = vmatpush1.msra.mxu0 %v1005
    %1852 = vmatprep.subr.mxu0 0.0
    %1853 = vmatpush1.msra.mxu0 %v1004
    %1854 = vmatprep.subr.mxu0 0.0
    %1855 = vmatpush1.msra.mxu0 %v1003
    %1856 = vmatprep.subr.mxu0 0.0
    %1857 = vmatpush2.msra.mxu0 0.0
    %1858 = vmatprep.subr.mxu0 0.0
    %1859 = vmatpush2.msra.mxu0 0.0
    %1860 = vmatprep.subr.mxu0 0.0
    %1861 = vmatpush2.msra.mxu0 0.0
    %1862 = vmatprep.subr.mxu0 0.0
    %1863 = vmatpush2.msra.mxu0 0.0
    %1864 = vmatprep.subr.mxu0 0.0
    %1865 = vmatpush2.msra.mxu0 0.0
    %1866 = vmatprep.subr.mxu0 0.0
    %1867 = vmatpush2.msra.mxu0 0.0
    %1868 = vmatprep.subr.mxu0 0.0
    %1869 = vmatpush2.msra.mxu0 0.0
    %1870 = vmatprep.subr.mxu0 0.0
    %1871 = vmatpush2.msra.mxu0 0.0
    %1872 = vmatprep.subr.mxu0 0.0
    %1873 = vmatpush2.msra.mxu0 0.0
    %1874 = vmatprep.subr.mxu0 0.0
    %1875 = vmatpush2.msra.mxu0 0.0
    %1876 = vmatprep.subr.mxu0 0.0
    %1877 = vmatpush2.msra.mxu0 0.0
    %1878 = vmatprep.subr.mxu0 0.0
    %1879 = vmatpush2.msra.mxu0 0.0
    %1880 = vmatprep.subr.mxu0 0.0
    %1881 = vmatpush2.msra.mxu0 0.0
    %1882 = vmatprep.subr.mxu0 0.0
    %1883 = vmatpush2.msra.mxu0 0.0
    %1884 = vmatprep.subr.mxu0 0.0
    %1885 = vmatpush2.msra.mxu0 0.0
    %1886 = vmatprep.subr.mxu0 0.0
    %1887 = vmatpush2.msra.mxu0 0.0
    %1888 = vmatprep.mubr.f32.mxu0 0.0
    %1889 = vmatmul.mubr.f32.gmra.mxu0 %v1822
    %v1890 = vpop.f32.mrf.mxu0
    %v1891 = vadd.f32 0.0, %v1890
    %v1892 = vpop.f32.mrf.mxu0
    %1893 = vdwg.mxu0
    %v1894 = vadd.f32 %v1121, %v1891
    %v1895 = vxor.u32 %v1894, 2147483648
    %v1896 = vmul.f32 %v1895, 1.442695
    %v1897 = vpow.pop %v1896
    %v1898 = vadd.f32 %v1897, 1.0
    %v1899 = vrcp.pop %v1898
    %v1900 = vmul.f32 1.0, %v1899
    %v1901 = vtanh.pop %v1894
    %v1902 = vmul.f32 %v1900, %v1812
    %1904 = vrot.lane.b32.xlu0 %v1901, 64
    %v1905 = vpop.permute.xlu0 %1904
    %v1907 = vmul.f32 %v1900, %v1905
    %1909 = vrot.lane.b32.xlu0 %v1907, 32
    %v1910 = vpop.permute.xlu0 %1909
    %v1912 = vadd.f32 %v1902, %v1910
    %v1913 = vtanh.pop %v1912
    %1915 = vrot.lane.b32.xlu0 %v1913, 64
    %v1916 = vpop.permute.xlu0 %1915
    %v1918 = vmul.f32 %v1900, %v1916
    %v1919 = vld [vmem:[#allocation2] sm:$0xff]
    %v1920 = vld [vmem:[#allocation2 + $0x8] sm:$0xff]
    %v1921 = vld [vmem:[#allocation2 + $0x10] sm:$0xff]
    %v1922 = vld [vmem:[#allocation2 + $0x18] sm:$0xff]
    %v1923 = vld [vmem:[%s8] sm:$0x1]
    %v1925 = vlaneseq
    %v1926 = vshrl.u32 %v1925, 7
    %v1927 = vsub.s32 0, %v1926
    %v1928 = vrot.slane %v1923, %v1927
    %1931 = vrot.lane.b32.xlu0 %v1918, 32
    %v1932 = vpop.permute.xlu0 %1931
    %v1933 = vsel %vm200, %v1932, 0
    %1935 = vmatprep.subr.mxu0 0.0
    %1936 = vmatpush1.msra.mxu0 0.0
    %1937 = vmatprep.subr.mxu0 0.0
    %1938 = vmatpush1.msra.mxu0 0.0
    %1939 = vmatprep.subr.mxu0 0.0
    %1940 = vmatpush1.msra.mxu0 0.0
    %1941 = vmatprep.subr.mxu0 0.0
    %1942 = vmatpush1.msra.mxu0 0.0
    %1943 = vmatprep.subr.mxu0 0.0
    %1944 = vmatpush1.msra.mxu0 0.0
    %1945 = vmatprep.subr.mxu0 0.0
    %1946 = vmatpush1.msra.mxu0 0.0
    %1947 = vmatprep.subr.mxu0 0.0
    %1948 = vmatpush1.msra.mxu0 0.0
    %1949 = vmatprep.subr.mxu0 0.0
    %1950 = vmatpush1.msra.mxu0 0.0
    %1951 = vmatprep.subr.mxu0 0.0
    %1952 = vmatpush1.msra.mxu0 0.0
    %1953 = vmatprep.subr.mxu0 0.0
    %1954 = vmatpush1.msra.mxu0 0.0
    %1955 = vmatprep.subr.mxu0 0.0
    %1956 = vmatpush1.msra.mxu0 0.0
    %1957 = vmatprep.subr.mxu0 0.0
    %1958 = vmatpush1.msra.mxu0 0.0
    %1959 = vmatprep.subr.mxu0 0.0
    %1960 = vmatpush1.msra.mxu0 %v1922
    %1961 = vmatprep.subr.mxu0 0.0
    %1962 = vmatpush1.msra.mxu0 %v1921
    %1963 = vmatprep.subr.mxu0 0.0
    %1964 = vmatpush1.msra.mxu0 %v1920
    %1965 = vmatprep.subr.mxu0 0.0
    %1966 = vmatpush1.msra.mxu0 %v1919
    %1967 = vmatprep.subr.mxu0 0.0
    %1968 = vmatpush2.msra.mxu0 0.0
    %1969 = vmatprep.subr.mxu0 0.0
    %1970 = vmatpush2.msra.mxu0 0.0
    %1971 = vmatprep.subr.mxu0 0.0
    %1972 = vmatpush2.msra.mxu0 0.0
    %1973 = vmatprep.subr.mxu0 0.0
    %1974 = vmatpush2.msra.mxu0 0.0
    %1975 = vmatprep.subr.mxu0 0.0
    %1976 = vmatpush2.msra.mxu0 0.0
    %1977 = vmatprep.subr.mxu0 0.0
    %1978 = vmatpush2.msra.mxu0 0.0
    %1979 = vmatprep.subr.mxu0 0.0
    %1980 = vmatpush2.msra.mxu0 0.0
    %1981 = vmatprep.subr.mxu0 0.0
    %1982 = vmatpush2.msra.mxu0 0.0
    %1983 = vmatprep.subr.mxu0 0.0
    %1984 = vmatpush2.msra.mxu0 0.0
    %1985 = vmatprep.subr.mxu0 0.0
    %1986 = vmatpush2.msra.mxu0 0.0
    %1987 = vmatprep.subr.mxu0 0.0
    %1988 = vmatpush2.msra.mxu0 0.0
    %1989 = vmatprep.subr.mxu0 0.0
    %1990 = vmatpush2.msra.mxu0 0.0
    %1991 = vmatprep.subr.mxu0 0.0
    %1992 = vmatpush2.msra.mxu0 0.0
    %1993 = vmatprep.subr.mxu0 0.0
    %1994 = vmatpush2.msra.mxu0 0.0
    %1995 = vmatprep.subr.mxu0 0.0
    %1996 = vmatpush2.msra.mxu0 0.0
    %1997 = vmatprep.subr.mxu0 0.0
    %1998 = vmatpush2.msra.mxu0 0.0
    %1999 = vmatprep.mubr.f32.mxu0 0.0
    %2000 = vmatmul.mubr.f32.gmra.mxu0 %v1933
    %v2001 = vpop.f32.mrf.mxu0
    %v2002 = vadd.f32 %v1928, %v2001
    %v2003 = vpop.f32.mrf.mxu0
    %2004 = vdwg.mxu0
    %2005 = vst [vmem:[%s9] sm:$0xff] %v2002
    // Predicated region
    $region42: #{_forward_impl.1} parent=1 // pred_check
      _
    $region43: #{_forward_impl.1} parent=1 // pred_check_branch
      %2007 = sbr.rel (0) target = $region45
    $region44: #{_forward_impl.1} parent=1 // pred_region
      _
    $region45: #{_forward_impl.1} parent=1 // pred_fallthru
      _
    // Predicated region
    $region46: #{_forward_impl.1} parent=1 // pred_check
      _
    $region47: #{_forward_impl.1} parent=1 // pred_check_branch
      %2009 = sbr.rel (0) target = $region49
    $region48: #{_forward_impl.1} parent=1 // pred_region
      _
    $region49: #{_forward_impl.1} parent=1 // pred_fallthru
      _
    %2010 = vsyncpa [#allocation3], 1

</llo_original>
